<compile_context>
chip_gen: v7x
topology: tpu7x:2x2x1
jax: 0.10.0
libtpu: 0.0.40
codegen_flags: <defaults>
</compile_context>

<pallas_src>
import functools

import jax
import jax.numpy as jnp
from jax.experimental import pallas as pl
from jax.experimental.pallas import tpu as pltpu

D_IN = 225        # original input / output feature dim
D_IN_PAD = 256    # lane-dense padded feature dim
D_H = 512         # hidden dim
D_Z = 20          # latent dim
ENC_PAD = 128     # lane-dense padded mu||logvar dim (>= 2*D_Z)
NEG_SLOPE = 0.01  # F.leaky_relu default negative slope


def _is_v5e():
    try:
        kind = jax.devices()[0].device_kind.lower()
        return ("v5 lite" in kind) or ("v5e" in kind) or ("v5litepod" in kind)
    except Exception:
        return False


# bf16 transcendentals on v6e/v7x (bf16 EUP); keep f32 on v5e (no bf16 EUP).
_TANH_BF16 = not _is_v5e()


def _leaky_relu(x):
    return jnp.where(x > 0, x, NEG_SLOPE * x)


def vae_kernel(x_ref, w1_ref, wenc_ref, w3_ref, w4_ref, b_ref,
               recon_ref, enc_ref, *, tanh_bf16):
    # packed biases (f32): row 0 = b1, row 1 = b21||b22 (padded to 128),
    #                      row 2 = b3, row 3 = b4 (padded to 256)
    bias = b_ref[...]
    b1 = bias[0:1, :]                    # (1, 512)
    b_enc = bias[1:2, :ENC_PAD]          # (1, 128)
    b3 = bias[2:3, :]                    # (1, 512)
    b4 = bias[3:4, :D_IN_PAD]            # (1, 256)

    x = x_ref[...]                       # bf16 (tb, 256); cols 225:245 carry eps

    # ---- encode ----
    h1 = jnp.dot(x, w1_ref[...], preferred_element_type=jnp.float32) + b1
    h1 = _leaky_relu(h1)

    # fused fc21 || fc22, padded to 128 output lanes (lane-dense store)
    enc = jnp.dot(h1.astype(jnp.bfloat16), wenc_ref[...],
                  preferred_element_type=jnp.float32) + b_enc    # (tb, 128)
    enc_ref[...] = enc

    mu = enc[:, :D_Z]
    logvar = enc[:, D_Z:2 * D_Z]

    # eps rides along in the (otherwise zero) padded x columns
    eps = x[:, D_IN:D_IN + D_Z].astype(jnp.float32)              # (tb, 20)

    # ---- reparametrize: z = eps * exp(0.5 * logvar) + mu (f32 on VPU/EUP) ----
    z = eps * jnp.exp(0.5 * logvar) + mu                         # (tb, 20)

    # ---- decode ----
    dh1 = jnp.dot(z.astype(jnp.bfloat16), w3_ref[...],
                  preferred_element_type=jnp.float32) + b3
    dh1 = _leaky_relu(dh1)
    pre = jnp.dot(dh1.astype(jnp.bfloat16), w4_ref[...],
                  preferred_element_type=jnp.float32) + b4       # (tb, 256) f32
    if tanh_bf16:
        recon_ref[...] = jnp.tanh(pre.astype(jnp.bfloat16))      # bf16 EUP
    else:
        recon_ref[...] = jnp.tanh(pre).astype(jnp.bfloat16)      # f32 EUP (v5e)


def init_params(key):
    """PyTorch-Linear-like init (uniform +-1/sqrt(fan_in)), then pad/fuse/cast."""
    def linear(k, fan_in, fan_out):
        kw, kb = jax.random.split(k)
        bound = 1.0 / (fan_in ** 0.5)
        w = jax.random.uniform(kw, (fan_in, fan_out), jnp.float32, -bound, bound)
        b = jax.random.uniform(kb, (fan_out,), jnp.float32, -bound, bound)
        return w, b

    k1, k21, k22, k3, k4 = jax.random.split(key, 5)
    w1, b1 = linear(k1, D_IN, D_H)       # (225, 512)
    w21, b21 = linear(k21, D_H, D_Z)     # (512, 20)
    w22, b22 = linear(k22, D_H, D_Z)     # (512, 20)
    w3, b3 = linear(k3, D_Z, D_H)        # (20, 512)
    w4, b4 = linear(k4, D_H, D_IN)       # (512, 225)

    # pad D_IN -> 256 (rows 225:256 of w1 are zero, so eps packed into those
    # x columns does not affect h1); fuse fc21/fc22 and pad to 128 columns;
    # cast all weights to bf16 once at init time.
    w1p = jnp.zeros((D_IN_PAD, D_H), jnp.float32).at[:D_IN].set(w1)
    w1p = w1p.astype(jnp.bfloat16)
    wenc = jnp.zeros((D_H, ENC_PAD), jnp.float32)
    wenc = wenc.at[:, :D_Z].set(w21).at[:, D_Z:2 * D_Z].set(w22)
    wenc = wenc.astype(jnp.bfloat16)                                   # (512, 128)
    w3b = w3.astype(jnp.bfloat16)                                      # (20, 512)
    w4p = jnp.zeros((D_H, D_IN_PAD), jnp.float32).at[:, :D_IN].set(w4)
    w4p = w4p.astype(jnp.bfloat16)

    # single packed bias buffer (f32), one DMA instead of five
    bias = jnp.zeros((4, D_H), jnp.float32)
    bias = bias.at[0, :].set(b1)
    bias = bias.at[1, :2 * D_Z].set(jnp.concatenate([b21, b22]))
    bias = bias.at[2, :].set(b3)
    bias = bias.at[3, :D_IN].set(b4)

    return (w1p, wenc, w3b, w4p, bias)


def vae_forward(x, params, eps, *, tb=512):
    """x: (B, 225) f32, eps: (B, 20) f32 -> (recon (B,225), mu (B,20), logvar (B,20))."""
    w1, wenc, w3, w4, bias = params
    B = x.shape[0]

    # batch padded to a multiple of 16 (bf16 sublane packing, v5e hygiene)
    Bp = pl.cdiv(B, 16) * 16
    # tile: big enough to amortize per-step overhead, capped for v7x VMEM
    tb = max(16, min(tb, 2048, Bp))
    # prefer >= 2 grid steps so both v7x TensorCores get work
    if Bp // tb < 2 and Bp >= 32:
        tb = max(16, (Bp // 2) // 16 * 16)
    Bp = pl.cdiv(Bp, tb) * tb
    grid = (Bp // tb,)

    # lane-dense bf16 input slab, built directly in bf16 (no padded f32 slab).
    # cols [:225] = x, cols [225:245] = eps, rest zero.
    xp = jnp.zeros((Bp, D_IN_PAD), jnp.bfloat16)
    xp = xp.at[:B, :D_IN].set(x.astype(jnp.bfloat16))
    xp = xp.at[:B, D_IN:D_IN + D_Z].set(eps.astype(jnp.bfloat16))

    kernel = functools.partial(vae_kernel, tanh_bf16=_TANH_BF16)

    recon_pad, enc = pl.pallas_call(
        kernel,
        grid=grid,
        in_specs=[
            pl.BlockSpec((tb, D_IN_PAD), lambda i: (i, 0)),    # x (+eps packed)
            pl.BlockSpec((D_IN_PAD, D_H), lambda i: (0, 0)),   # w1 (resident)
            pl.BlockSpec((D_H, ENC_PAD), lambda i: (0, 0)),    # wenc (resident)
            pl.BlockSpec((D_Z, D_H), lambda i: (0, 0)),        # w3 (resident)
            pl.BlockSpec((D_H, D_IN_PAD), lambda i: (0, 0)),   # w4 (resident)
            pl.BlockSpec((4, D_H), lambda i: (0, 0)),          # packed biases
        ],
        out_specs=(
            pl.BlockSpec((tb, D_IN_PAD), lambda i: (i, 0)),    # recon (bf16, padded)
            pl.BlockSpec((tb, ENC_PAD), lambda i: (i, 0)),     # mu || logvar (padded)
        ),
        out_shape=(
            jax.ShapeDtypeStruct((Bp, D_IN_PAD), jnp.bfloat16),
            jax.ShapeDtypeStruct((Bp, ENC_PAD), jnp.float32),
        ),
        compiler_params=pltpu.CompilerParams(
            dimension_semantics=("parallel",)),
    )(xp, w1, wenc, w3, w4, bias)

    # wrapper-side slicing back to the module's logical shapes (free plumbing)
    recon = recon_pad[:B, :D_IN].astype(jnp.float32)
    mu = enc[:B, :D_Z]
    logvar = enc[:B, D_Z:2 * D_Z]
    return recon, mu, logvar


def vae_reference(x, params, eps):
    """Pure-JAX reference mirroring the kernel's bf16 weight/activation dtypes."""
    w1, wenc, w3, w4, bias = params
    B = x.shape[0]
    xp = jnp.zeros((B, D_IN_PAD), jnp.bfloat16).at[:, :D_IN].set(
        x.astype(jnp.bfloat16))
    b1 = bias[0:1, :]
    b_enc = bias[1:2, :ENC_PAD]
    b3 = bias[2:3, :]
    b4 = bias[3:4, :D_IN_PAD]

    h1 = jnp.dot(xp, w1, preferred_element_type=jnp.float32) + b1
    h1 = _leaky_relu(h1)
    enc = jnp.dot(h1.astype(jnp.bfloat16), wenc,
                  preferred_element_type=jnp.float32) + b_enc
    mu, logvar = enc[:, :D_Z], enc[:, D_Z:2 * D_Z]
    eps_b = eps.astype(jnp.bfloat16).astype(jnp.float32)   # eps rides in bf16 x slab
    z = eps_b * jnp.exp(0.5 * logvar) + mu
    dh1 = jnp.dot(z.astype(jnp.bfloat16), w3,
                  preferred_element_type=jnp.float32) + b3
    dh1 = _leaky_relu(dh1)
    pre = jnp.dot(dh1.astype(jnp.bfloat16), w4,
                  preferred_element_type=jnp.float32) + b4
    if _TANH_BF16:
        recon = jnp.tanh(pre.astype(jnp.bfloat16))
    else:
        recon = jnp.tanh(pre).astype(jnp.bfloat16)
    return recon[:, :D_IN].astype(jnp.float32), mu, logvar


if __name__ == "__main__":
    B = 8  # small batch for the demo run
    root = jax.random.PRNGKey(0)
    k_param, k_x, k_eps = jax.random.split(root, 3)

    params = init_params(k_param)
    x = jax.random.normal(k_x, (B, D_IN), jnp.float32)
    eps = jax.random.normal(k_eps, (B, D_Z), jnp.float32)  # reparametrization noise

    fwd = jax.jit(lambda x_, p_, e_: vae_forward(x_, p_, e_))
    recon, mu, logvar = fwd(x, params, eps)
    jax.block_until_ready((recon, mu, logvar))

    # shape / range sanity
    assert recon.shape == (B, D_IN) and mu.shape == (B, D_Z) and logvar.shape == (B, D_Z)
    assert bool(jnp.all(jnp.isfinite(recon)))
    assert bool(jnp.all(jnp.abs(recon) <= 1.0))

    # numerical check against a pure-JAX reference using identical bf16 params
    r_ref, mu_ref, lv_ref = vae_reference(x, params, eps)
    assert bool(jnp.max(jnp.abs(recon - r_ref)) < 2e-2)
    assert bool(jnp.max(jnp.abs(mu - mu_ref)) < 2e-2)
    assert bool(jnp.max(jnp.abs(logvar - lv_ref)) < 2e-2)

    print("KERNEL_OK")
</pallas_src>

<mosaic_0001>
module attributes {stable_mosaic.version = 11 : i64} {
  func.func @vae_kernel(%arg0: i32, %arg1: memref<16x256xbf16, #tpu.memory_space<vmem>>, %arg2: memref<256x512xbf16, #tpu.memory_space<vmem>>, %arg3: memref<512x128xbf16, #tpu.memory_space<vmem>>, %arg4: memref<20x512xbf16, #tpu.memory_space<vmem>>, %arg5: memref<512x256xbf16, #tpu.memory_space<vmem>>, %arg6: memref<4x512xf32, #tpu.memory_space<vmem>>, %arg7: memref<16x256xbf16, #tpu.memory_space<vmem>>, %arg8: memref<16x128xf32, #tpu.memory_space<vmem>>) attributes {dimension_semantics = [#tpu.dimension_semantics<parallel>], iteration_bounds = array<i64: 1>, scalar_prefetch = 0 : i64, scratch_operands = 0 : i64, tpu.core_type = #tpu.core_type<tc>, window_params = [{transform_indices = @transform_0, window_bounds = array<i64: 16, 256>}, {pipeline_mode = #tpu.pipeline_mode<synchronous>, transform_indices = @transform_1, window_bounds = array<i64: 256, 512>}, {pipeline_mode = #tpu.pipeline_mode<synchronous>, transform_indices = @transform_2, window_bounds = array<i64: 512, 128>}, {pipeline_mode = #tpu.pipeline_mode<synchronous>, transform_indices = @transform_3, window_bounds = array<i64: 20, 512>}, {pipeline_mode = #tpu.pipeline_mode<synchronous>, transform_indices = @transform_4, window_bounds = array<i64: 512, 256>}, {pipeline_mode = #tpu.pipeline_mode<synchronous>, transform_indices = @transform_5, window_bounds = array<i64: 4, 512>}, {transform_indices = @transform_6, window_bounds = array<i64: 16, 256>}, {transform_indices = @transform_7, window_bounds = array<i64: 16, 128>}]} {
    %c0 = arith.constant 0 : index
    %c0_0 = arith.constant 0 : index
    %0 = vector.load %arg6[%c0, %c0_0] : memref<4x512xf32, #tpu.memory_space<vmem>>, vector<4x512xf32>
    %1 = vector.extract_strided_slice %0 {offsets = [0, 0], sizes = [1, 512], strides = [1, 1]} : vector<4x512xf32> to vector<1x512xf32>
    %2 = vector.extract_strided_slice %0 {offsets = [1, 0], sizes = [1, 128], strides = [1, 1]} : vector<4x512xf32> to vector<1x128xf32>
    %3 = vector.extract_strided_slice %0 {offsets = [2, 0], sizes = [1, 512], strides = [1, 1]} : vector<4x512xf32> to vector<1x512xf32>
    %4 = vector.extract_strided_slice %0 {offsets = [3, 0], sizes = [1, 256], strides = [1, 1]} : vector<4x512xf32> to vector<1x256xf32>
    %c0_1 = arith.constant 0 : index
    %c0_2 = arith.constant 0 : index
    %5 = vector.load %arg1[%c0_1, %c0_2] : memref<16x256xbf16, #tpu.memory_space<vmem>>, vector<16x256xbf16>
    %c0_3 = arith.constant 0 : index
    %c0_4 = arith.constant 0 : index
    %6 = vector.load %arg2[%c0_3, %c0_4] : memref<256x512xbf16, #tpu.memory_space<vmem>>, vector<256x512xbf16>
    %cst = arith.constant dense<0.000000e+00> : vector<16x512xf32>
    %7 = tpu.matmul %5, %6, %cst {dimension_numbers = #tpu.dot_dimension_numbers<[1], [0], [0], [1], [0, 0, 1, 1], [], []>} : vector<16x256xbf16>, vector<256x512xbf16>, vector<16x512xf32> -> vector<16x512xf32>
    %8 = vector.broadcast %1 : vector<1x512xf32> to vector<16x512xf32>
    %9 = arith.addf %7, %8 : vector<16x512xf32>
    %cst_5 = arith.constant 0.000000e+00 : f32
    %10 = vector.broadcast %cst_5 : f32 to vector<16x512xf32>
    %11 = arith.cmpf ogt, %9, %10 : vector<16x512xf32>
    %cst_6 = arith.constant 0.00999999977 : f32
    %12 = vector.broadcast %cst_6 : f32 to vector<16x512xf32>
    %13 = arith.mulf %12, %9 : vector<16x512xf32>
    %14 = arith.select %11, %9, %13 : vector<16x512xi1>, vector<16x512xf32>
    %15 = arith.truncf %14 : vector<16x512xf32> to vector<16x512xbf16>
    %c0_7 = arith.constant 0 : index
    %c0_8 = arith.constant 0 : index
    %16 = vector.load %arg3[%c0_7, %c0_8] : memref<512x128xbf16, #tpu.memory_space<vmem>>, vector<512x128xbf16>
    %cst_9 = arith.constant dense<0.000000e+00> : vector<16x128xf32>
    %17 = tpu.matmul %15, %16, %cst_9 {dimension_numbers = #tpu.dot_dimension_numbers<[1], [0], [0], [1], [0, 0, 1, 1], [], []>} : vector<16x512xbf16>, vector<512x128xbf16>, vector<16x128xf32> -> vector<16x128xf32>
    %18 = vector.broadcast %2 : vector<1x128xf32> to vector<16x128xf32>
    %19 = arith.addf %17, %18 : vector<16x128xf32>
    %c0_10 = arith.constant 0 : index
    %c0_11 = arith.constant 0 : index
    %20 = vector.load %arg8[%c0_10, %c0_11] : memref<16x128xf32, #tpu.memory_space<vmem>>, vector<16x128xf32>
    tpu.vector_store %arg8[%c0_10, %c0_11], %19 {strides = array<i32>} : memref<16x128xf32, #tpu.memory_space<vmem>>, vector<16x128xf32>,
    %21 = vector.extract_strided_slice %19 {offsets = [0, 0], sizes = [16, 20], strides = [1, 1]} : vector<16x128xf32> to vector<16x20xf32>
    %22 = vector.extract_strided_slice %19 {offsets = [0, 20], sizes = [16, 20], strides = [1, 1]} : vector<16x128xf32> to vector<16x20xf32>
    %23 = vector.extract_strided_slice %5 {offsets = [0, 225], sizes = [16, 20], strides = [1, 1]} : vector<16x256xbf16> to vector<16x20xbf16>
    %24 = arith.extf %23 : vector<16x20xbf16> to vector<16x20xf32>
    %cst_12 = arith.constant 5.000000e-01 : f32
    %25 = vector.broadcast %cst_12 : f32 to vector<16x20xf32>
    %26 = arith.mulf %25, %22 : vector<16x20xf32>
    %27 = math.exp %26 : vector<16x20xf32>
    %28 = arith.mulf %24, %27 : vector<16x20xf32>
    %29 = arith.addf %28, %21 : vector<16x20xf32>
    %30 = arith.truncf %29 : vector<16x20xf32> to vector<16x20xbf16>
    %c0_13 = arith.constant 0 : index
    %c0_14 = arith.constant 0 : index
    %31 = vector.load %arg4[%c0_13, %c0_14] : memref<20x512xbf16, #tpu.memory_space<vmem>>, vector<20x512xbf16>
    %cst_15 = arith.constant dense<0.000000e+00> : vector<16x512xf32>
    %32 = tpu.matmul %30, %31, %cst_15 {dimension_numbers = #tpu.dot_dimension_numbers<[1], [0], [0], [1], [0, 0, 1, 1], [], []>} : vector<16x20xbf16>, vector<20x512xbf16>, vector<16x512xf32> -> vector<16x512xf32>
    %33 = vector.broadcast %3 : vector<1x512xf32> to vector<16x512xf32>
    %34 = arith.addf %32, %33 : vector<16x512xf32>
    %cst_16 = arith.constant 0.000000e+00 : f32
    %35 = vector.broadcast %cst_16 : f32 to vector<16x512xf32>
    %36 = arith.cmpf ogt, %34, %35 : vector<16x512xf32>
    %cst_17 = arith.constant 0.00999999977 : f32
    %37 = vector.broadcast %cst_17 : f32 to vector<16x512xf32>
    %38 = arith.mulf %37, %34 : vector<16x512xf32>
    %39 = arith.select %36, %34, %38 : vector<16x512xi1>, vector<16x512xf32>
    %40 = arith.truncf %39 : vector<16x512xf32> to vector<16x512xbf16>
    %c0_18 = arith.constant 0 : index
    %c0_19 = arith.constant 0 : index
    %41 = vector.load %arg5[%c0_18, %c0_19] : memref<512x256xbf16, #tpu.memory_space<vmem>>, vector<512x256xbf16>
    %cst_20 = arith.constant dense<0.000000e+00> : vector<16x256xf32>
    %42 = tpu.matmul %40, %41, %cst_20 {dimension_numbers = #tpu.dot_dimension_numbers<[1], [0], [0], [1], [0, 0, 1, 1], [], []>} : vector<16x512xbf16>, vector<512x256xbf16>, vector<16x256xf32> -> vector<16x256xf32>
    %43 = vector.broadcast %4 : vector<1x256xf32> to vector<16x256xf32>
    %44 = arith.addf %42, %43 : vector<16x256xf32>
    %45 = arith.truncf %44 : vector<16x256xf32> to vector<16x256xbf16>
    %46 = math.tanh %45 : vector<16x256xbf16>
    %c0_21 = arith.constant 0 : index
    %c0_22 = arith.constant 0 : index
    %47 = vector.load %arg7[%c0_21, %c0_22] : memref<16x256xbf16, #tpu.memory_space<vmem>>, vector<16x256xbf16>
    tpu.vector_store %arg7[%c0_21, %c0_22], %46 {strides = array<i32>} : memref<16x256xbf16, #tpu.memory_space<vmem>>, vector<16x256xbf16>,
    return
  }
  func.func @transform_0(%arg0: i32) -> (i32, i32) {
    %c0_i32 = arith.constant 0 : i32
    %c0_i32_0 = arith.constant 0 : i32
    return %arg0, %c0_i32 : i32, i32
  }
  func.func @transform_1(%arg0: i32) -> (i32, i32) {
    %c0_i32 = arith.constant 0 : i32
    %c0_i32_0 = arith.constant 0 : i32
    %c0_i32_1 = arith.constant 0 : i32
    return %c0_i32, %c0_i32_0 : i32, i32
  }
  func.func @transform_2(%arg0: i32) -> (i32, i32) {
    %c0_i32 = arith.constant 0 : i32
    %c0_i32_0 = arith.constant 0 : i32
    %c0_i32_1 = arith.constant 0 : i32
    return %c0_i32, %c0_i32_0 : i32, i32
  }
  func.func @transform_3(%arg0: i32) -> (i32, i32) {
    %c0_i32 = arith.constant 0 : i32
    %c0_i32_0 = arith.constant 0 : i32
    %c0_i32_1 = arith.constant 0 : i32
    return %c0_i32, %c0_i32_0 : i32, i32
  }
  func.func @transform_4(%arg0: i32) -> (i32, i32) {
    %c0_i32 = arith.constant 0 : i32
    %c0_i32_0 = arith.constant 0 : i32
    %c0_i32_1 = arith.constant 0 : i32
    return %c0_i32, %c0_i32_0 : i32, i32
  }
  func.func @transform_5(%arg0: i32) -> (i32, i32) {
    %c0_i32 = arith.constant 0 : i32
    %c0_i32_0 = arith.constant 0 : i32
    %c0_i32_1 = arith.constant 0 : i32
    return %c0_i32, %c0_i32_0 : i32, i32
  }
  func.func @transform_6(%arg0: i32) -> (i32, i32) {
    %c0_i32 = arith.constant 0 : i32
    %c0_i32_0 = arith.constant 0 : i32
    return %arg0, %c0_i32 : i32, i32
  }
  func.func @transform_7(%arg0: i32) -> (i32, i32) {
    %c0_i32 = arith.constant 0 : i32
    %c0_i32_0 = arith.constant 0 : i32
    return %arg0, %c0_i32 : i32, i32
  }
}

</mosaic_0001>

<llo_original>
// kernel: _lambda_.1
$region0: #{_lambda_.1}
  #allocation0 [shape = 'u32[]', space=smem, size = 0x4, offset = 0x4, fixed_abs, tag = 'smem constant byte address 0x4 - core index']
  #allocation1 [shape = 'u32[144,128]{1,0:T(1,128)}', space=vmem, size = 0x12000, scoped, tag = 'internal scratch']
  %s0 = inlined_call_operand.vmem [shape: bf16[16,256], index: 0, kind: input, shape index: {}]
  %s1 = inlined_call_operand.hbm [shape: bf16[256,512], index: 1, kind: input, shape index: {}]
  %s2 = inlined_call_operand.hbm [shape: bf16[512,128], index: 2, kind: input, shape index: {}]
  %s3 = inlined_call_operand.vmem [shape: bf16[20,512], index: 3, kind: input, shape index: {}]
  %s4 = inlined_call_operand.hbm [shape: bf16[512,256], index: 4, kind: input, shape index: {}]
  %s5 = inlined_call_operand.vmem [shape: f32[4,512], index: 5, kind: input, shape index: {}]
  %s6 = inlined_call_operand.vmem [shape: bf16[16,256], index: 6, kind: output, shape index: {0}]
  %s7 = inlined_call_operand.vmem [shape: f32[16,128], index: 7, kind: output, shape index: {1}]
  %8 = xla_tuple %s6, %s7
  %s9 = sld [smem:[#allocation0]]
  $region54: #{_lambda_.1} parent=0
    _
  %s11 = ssub.s32 1, %s9
  %s12 = scalar_select 0, %s11, %s9
  $region1: #{_lambda_.1} parent=0
    #allocation2 [shape = 'u8[262144]{0}', space=vmem, size = 0x40000, scoped, tag = 'input window, operand 1, single buffered']
    #allocation3 [shape = 's32[1]{0}', space=sflag, size = 0x4, scoped, tag = 'scoped memory for _lambda_.1']
    #allocation4 [shape = 'u8[131072]{0}', space=vmem, size = 0x20000, scoped, tag = 'input window, operand 2, single buffered']
    #allocation5 [shape = 's32[1]{0}', space=sflag, size = 0x4, scoped, tag = 'scoped memory for _lambda_.1']
    #allocation6 [shape = 'u8[262144]{0}', space=vmem, size = 0x40000, scoped, tag = 'input window, operand 4, single buffered']
    %13 = vsyncpa [#allocation3], 0
    %14 = vsyncpa [#allocation5], 0
    // Predicated region
    $region2: #{_lambda_.1} parent=1 // pred_check
      _
    $region3: #{_lambda_.1} parent=1 // pred_check_branch
      %16 = sbr.rel (0) target = $region5
    $region4: #{_lambda_.1} parent=1 // pred_region
      _
    $region5: #{_lambda_.1} parent=1 // pred_fallthru
      _
    // Predicated region
    $region6: #{_lambda_.1} parent=1 // pred_check
      _
    $region7: #{_lambda_.1} parent=1 // pred_check_branch
      %18 = sbr.rel (0) target = $region9
    $region8: #{_lambda_.1} parent=1 // pred_region
      %s20 = ssub.s32 8192, 8192
      %21 = vsyncadd [#allocation3], %s20
      %s22 = sshll.u32 [#allocation2], 4
      %s23 = int_to_ptr.vmem [resolvable:$true] %s22
      %28 = dma.hbm_to_vmem [thread:$0]  %s1, 8192, %s23, [#allocation3], 256, 256, 16
    $region9: #{_lambda_.1} parent=1 // pred_fallthru
      _
    // Predicated region
    $region10: #{_lambda_.1} parent=1 // pred_check
      _
    $region11: #{_lambda_.1} parent=1 // pred_check_branch
      %30 = sbr.rel (0) target = $region13
    $region12: #{_lambda_.1} parent=1 // pred_region
      %s32 = ssub.s32 4096, 4096
      %33 = vsyncadd [#allocation5], %s32
      %s34 = sshll.u32 [#allocation4], 4
      %s35 = int_to_ptr.vmem [resolvable:$true] %s34
      %40 = dma.hbm_to_vmem [thread:$0]  %s2, 4096, %s35, [#allocation5], 64, 64, 4
    $region13: #{_lambda_.1} parent=1 // pred_fallthru
      _
    // Predicated region
    $region14: #{_lambda_.1} parent=1 // pred_check
      _
    $region15: #{_lambda_.1} parent=1 // pred_check_branch
      %42 = sbr.rel (0) target = $region17
    $region16: #{_lambda_.1} parent=1 // pred_region
      _
    $region17: #{_lambda_.1} parent=1 // pred_fallthru
      _
    // Predicated region
    $region18: #{_lambda_.1} parent=1 // pred_check
      _
    $region19: #{_lambda_.1} parent=1 // pred_check_branch
      %44 = sbr.rel (0) target = $region21
    $region20: #{_lambda_.1} parent=1 // pred_region
      %s46 = ssub.s32 8192, 8192
      %47 = vsyncadd [#allocation5], %s46
      %s48 = sshll.u32 [#allocation6], 4
      %s49 = int_to_ptr.vmem [resolvable:$true] %s48
      %54 = dma.hbm_to_vmem [thread:$0]  %s4, 8192, %s49, [#allocation5], 128, 128, 8
    $region21: #{_lambda_.1} parent=1 // pred_fallthru
      _
    // Predicated region
    $region22: #{_lambda_.1} parent=1 // pred_check
      _
    $region23: #{_lambda_.1} parent=1 // pred_check_branch
      %56 = sbr.rel (0) target = $region25
    $region24: #{_lambda_.1} parent=1 // pred_region
      _
    $region25: #{_lambda_.1} parent=1 // pred_fallthru
      _
    // Predicated region
    $region26: #{_lambda_.1} parent=1 // pred_check
      _
    $region27: #{_lambda_.1} parent=1 // pred_check_branch
      %58 = sbr.rel (0) target = $region29
    $region28: #{_lambda_.1} parent=1 // pred_region
      %59 = dma.done [#allocation3], 8192
    $region29: #{_lambda_.1} parent=1 // pred_fallthru
      _
    // Predicated region
    $region30: #{_lambda_.1} parent=1 // pred_check
      _
    $region31: #{_lambda_.1} parent=1 // pred_check_branch
      %61 = sbr.rel (0) target = $region33
    $region32: #{_lambda_.1} parent=1 // pred_region
      %62 = dma.done [#allocation5], 4096
    $region33: #{_lambda_.1} parent=1 // pred_fallthru
      _
    // Predicated region
    $region34: #{_lambda_.1} parent=1 // pred_check
      _
    $region35: #{_lambda_.1} parent=1 // pred_check_branch
      %64 = sbr.rel (0) target = $region37
    $region36: #{_lambda_.1} parent=1 // pred_region
      %65 = dma.done [#allocation5], 8192
    $region37: #{_lambda_.1} parent=1 // pred_fallthru
      _
    %v67 = vld [vmem:[%s5] sm:$0xff]
    %v68 = vld [vmem:[%s5 + $0x8] sm:$0xff]
    %v69 = vld [vmem:[%s0] sm:$0xff]
    %v70 = vld [vmem:[%s0 + $0x8] sm:$0xff]
    %v71 = vld [vmem:[#allocation2] sm:$0xff]
    %v72 = vld [vmem:[#allocation2 + $0x8] sm:$0xff]
    %v73 = vld [vmem:[#allocation2 + $0x10] sm:$0xff]
    %v74 = vld [vmem:[#allocation2 + $0x18] sm:$0xff]
    %v75 = vld [vmem:[#allocation2 + $0x20] sm:$0xff]
    %v76 = vld [vmem:[#allocation2 + $0x28] sm:$0xff]
    %v77 = vld [vmem:[#allocation2 + $0x30] sm:$0xff]
    %v78 = vld [vmem:[#allocation2 + $0x38] sm:$0xff]
    %v79 = vld [vmem:[#allocation2 + $0x40] sm:$0xff]
    %v80 = vld [vmem:[#allocation2 + $0x48] sm:$0xff]
    %v81 = vld [vmem:[#allocation2 + $0x50] sm:$0xff]
    %v82 = vld [vmem:[#allocation2 + $0x58] sm:$0xff]
    %v83 = vld [vmem:[#allocation2 + $0x60] sm:$0xff]
    %v84 = vld [vmem:[#allocation2 + $0x68] sm:$0xff]
    %v85 = vld [vmem:[#allocation2 + $0x70] sm:$0xff]
    %v86 = vld [vmem:[#allocation2 + $0x78] sm:$0xff]
    %v87 = vld [vmem:[#allocation2 + $0x80] sm:$0xff]
    %v88 = vld [vmem:[#allocation2 + $0x88] sm:$0xff]
    %v89 = vld [vmem:[#allocation2 + $0x90] sm:$0xff]
    %v90 = vld [vmem:[#allocation2 + $0x98] sm:$0xff]
    %v91 = vld [vmem:[#allocation2 + $0xa0] sm:$0xff]
    %v92 = vld [vmem:[#allocation2 + $0xa8] sm:$0xff]
    %v93 = vld [vmem:[#allocation2 + $0xb0] sm:$0xff]
    %v94 = vld [vmem:[#allocation2 + $0xb8] sm:$0xff]
    %v95 = vld [vmem:[#allocation2 + $0xc0] sm:$0xff]
    %v96 = vld [vmem:[#allocation2 + $0xc8] sm:$0xff]
    %v97 = vld [vmem:[#allocation2 + $0xd0] sm:$0xff]
    %v98 = vld [vmem:[#allocation2 + $0xd8] sm:$0xff]
    %v99 = vld [vmem:[#allocation2 + $0xe0] sm:$0xff]
    %v100 = vld [vmem:[#allocation2 + $0xe8] sm:$0xff]
    %v101 = vld [vmem:[#allocation2 + $0xf0] sm:$0xff]
    %v102 = vld [vmem:[#allocation2 + $0xf8] sm:$0xff]
    %v103 = vld [vmem:[#allocation2 + $0x100] sm:$0xff]
    %v104 = vld [vmem:[#allocation2 + $0x108] sm:$0xff]
    %v105 = vld [vmem:[#allocation2 + $0x110] sm:$0xff]
    %v106 = vld [vmem:[#allocation2 + $0x118] sm:$0xff]
    %v107 = vld [vmem:[#allocation2 + $0x120] sm:$0xff]
    %v108 = vld [vmem:[#allocation2 + $0x128] sm:$0xff]
    %v109 = vld [vmem:[#allocation2 + $0x130] sm:$0xff]
    %v110 = vld [vmem:[#allocation2 + $0x138] sm:$0xff]
    %v111 = vld [vmem:[#allocation2 + $0x140] sm:$0xff]
    %v112 = vld [vmem:[#allocation2 + $0x148] sm:$0xff]
    %v113 = vld [vmem:[#allocation2 + $0x150] sm:$0xff]
    %v114 = vld [vmem:[#allocation2 + $0x158] sm:$0xff]
    %v115 = vld [vmem:[#allocation2 + $0x160] sm:$0xff]
    %v116 = vld [vmem:[#allocation2 + $0x168] sm:$0xff]
    %v117 = vld [vmem:[#allocation2 + $0x170] sm:$0xff]
    %v118 = vld [vmem:[#allocation2 + $0x178] sm:$0xff]
    %v119 = vld [vmem:[#allocation2 + $0x180] sm:$0xff]
    %v120 = vld [vmem:[#allocation2 + $0x188] sm:$0xff]
    %v121 = vld [vmem:[#allocation2 + $0x190] sm:$0xff]
    %v122 = vld [vmem:[#allocation2 + $0x198] sm:$0xff]
    %v123 = vld [vmem:[#allocation2 + $0x1a0] sm:$0xff]
    %v124 = vld [vmem:[#allocation2 + $0x1a8] sm:$0xff]
    %v125 = vld [vmem:[#allocation2 + $0x1b0] sm:$0xff]
    %v126 = vld [vmem:[#allocation2 + $0x1b8] sm:$0xff]
    %v127 = vld [vmem:[#allocation2 + $0x1c0] sm:$0xff]
    %v128 = vld [vmem:[#allocation2 + $0x1c8] sm:$0xff]
    %v129 = vld [vmem:[#allocation2 + $0x1d0] sm:$0xff]
    %v130 = vld [vmem:[#allocation2 + $0x1d8] sm:$0xff]
    %v131 = vld [vmem:[#allocation2 + $0x1e0] sm:$0xff]
    %v132 = vld [vmem:[#allocation2 + $0x1e8] sm:$0xff]
    %v133 = vld [vmem:[#allocation2 + $0x1f0] sm:$0xff]
    %v134 = vld [vmem:[#allocation2 + $0x1f8] sm:$0xff]
    %v137 = vlaneseq
    %v138 = vshrl.u32 %v137, 7
    %v139 = vsub.s32 0, %v138
    %v140 = vrot.slane %v67, %v139
    %v141 = vlaneseq
    %v142 = vshrl.u32 %v141, 7
    %v143 = vsub.s32 4, %v142
    %v144 = vrot.slane %v67, %v143
    %v145 = vlaneseq
    %v146 = vshrl.u32 %v145, 7
    %v147 = vsub.s32 0, %v146
    %v148 = vrot.slane %v68, %v147
    %v149 = vlaneseq
    %v150 = vshrl.u32 %v149, 7
    %v151 = vsub.s32 4, %v150
    %v152 = vrot.slane %v68, %v151
    %v157 = vlaneseq
    %v158 = vshrl.u32 %v157, 7
    %v159 = vsub.s32 0, %v158
    %v160 = vrot.slane %v140, %v159
    %v161 = vlaneseq
    %v162 = vshrl.u32 %v161, 7
    %v163 = vsub.s32 0, %v162
    %v164 = vrot.slane %v144, %v163
    %v165 = vlaneseq
    %v166 = vshrl.u32 %v165, 7
    %v167 = vsub.s32 0, %v166
    %v168 = vrot.slane %v148, %v167
    %v169 = vlaneseq
    %v170 = vshrl.u32 %v169, 7
    %v171 = vsub.s32 0, %v170
    %v172 = vrot.slane %v152, %v171
    %v175 = vunpack.c.l.b16 %v69
    %v176 = vunpack.c.h.b16 %v69
    %v177 = vunpack.c.l.b16 %v70
    %v178 = vunpack.c.h.b16 %v70
    %v179 = vpack.c.b16 %v177, %v175
    %v180 = vpack.c.b16 %v178, %v176
    %v247 = vunpack.c.l.b16 %v71
    %v248 = vunpack.c.h.b16 %v71
    %v249 = vunpack.c.l.b16 %v72
    %v250 = vunpack.c.h.b16 %v72
    %v251 = vunpack.c.l.b16 %v73
    %v252 = vunpack.c.h.b16 %v73
    %v253 = vunpack.c.l.b16 %v74
    %v254 = vunpack.c.h.b16 %v74
    %v255 = vunpack.c.l.b16 %v75
    %v256 = vunpack.c.h.b16 %v75
    %v257 = vunpack.c.l.b16 %v76
    %v258 = vunpack.c.h.b16 %v76
    %v259 = vunpack.c.l.b16 %v77
    %v260 = vunpack.c.h.b16 %v77
    %v261 = vunpack.c.l.b16 %v78
    %v262 = vunpack.c.h.b16 %v78
    %v263 = vunpack.c.l.b16 %v79
    %v264 = vunpack.c.h.b16 %v79
    %v265 = vunpack.c.l.b16 %v80
    %v266 = vunpack.c.h.b16 %v80
    %v267 = vunpack.c.l.b16 %v81
    %v268 = vunpack.c.h.b16 %v81
    %v269 = vunpack.c.l.b16 %v82
    %v270 = vunpack.c.h.b16 %v82
    %v271 = vunpack.c.l.b16 %v83
    %v272 = vunpack.c.h.b16 %v83
    %v273 = vunpack.c.l.b16 %v84
    %v274 = vunpack.c.h.b16 %v84
    %v275 = vunpack.c.l.b16 %v85
    %v276 = vunpack.c.h.b16 %v85
    %v277 = vunpack.c.l.b16 %v86
    %v278 = vunpack.c.h.b16 %v86
    %v279 = vunpack.c.l.b16 %v87
    %v280 = vunpack.c.h.b16 %v87
    %v281 = vunpack.c.l.b16 %v88
    %v282 = vunpack.c.h.b16 %v88
    %v283 = vunpack.c.l.b16 %v89
    %v284 = vunpack.c.h.b16 %v89
    %v285 = vunpack.c.l.b16 %v90
    %v286 = vunpack.c.h.b16 %v90
    %v287 = vunpack.c.l.b16 %v91
    %v288 = vunpack.c.h.b16 %v91
    %v289 = vunpack.c.l.b16 %v92
    %v290 = vunpack.c.h.b16 %v92
    %v291 = vunpack.c.l.b16 %v93
    %v292 = vunpack.c.h.b16 %v93
    %v293 = vunpack.c.l.b16 %v94
    %v294 = vunpack.c.h.b16 %v94
    %v295 = vunpack.c.l.b16 %v95
    %v296 = vunpack.c.h.b16 %v95
    %v297 = vunpack.c.l.b16 %v96
    %v298 = vunpack.c.h.b16 %v96
    %v299 = vunpack.c.l.b16 %v97
    %v300 = vunpack.c.h.b16 %v97
    %v301 = vunpack.c.l.b16 %v98
    %v302 = vunpack.c.h.b16 %v98
    %v303 = vunpack.c.l.b16 %v99
    %v304 = vunpack.c.h.b16 %v99
    %v305 = vunpack.c.l.b16 %v100
    %v306 = vunpack.c.h.b16 %v100
    %v307 = vunpack.c.l.b16 %v101
    %v308 = vunpack.c.h.b16 %v101
    %v309 = vunpack.c.l.b16 %v102
    %v310 = vunpack.c.h.b16 %v102
    %v311 = vunpack.c.l.b16 %v103
    %v312 = vunpack.c.h.b16 %v103
    %v313 = vunpack.c.l.b16 %v104
    %v314 = vunpack.c.h.b16 %v104
    %v315 = vunpack.c.l.b16 %v105
    %v316 = vunpack.c.h.b16 %v105
    %v317 = vunpack.c.l.b16 %v106
    %v318 = vunpack.c.h.b16 %v106
    %v319 = vunpack.c.l.b16 %v107
    %v320 = vunpack.c.h.b16 %v107
    %v321 = vunpack.c.l.b16 %v108
    %v322 = vunpack.c.h.b16 %v108
    %v323 = vunpack.c.l.b16 %v109
    %v324 = vunpack.c.h.b16 %v109
    %v325 = vunpack.c.l.b16 %v110
    %v326 = vunpack.c.h.b16 %v110
    %v327 = vunpack.c.l.b16 %v111
    %v328 = vunpack.c.h.b16 %v111
    %v329 = vunpack.c.l.b16 %v112
    %v330 = vunpack.c.h.b16 %v112
    %v331 = vunpack.c.l.b16 %v113
    %v332 = vunpack.c.h.b16 %v113
    %v333 = vunpack.c.l.b16 %v114
    %v334 = vunpack.c.h.b16 %v114
    %v335 = vunpack.c.l.b16 %v115
    %v336 = vunpack.c.h.b16 %v115
    %v337 = vunpack.c.l.b16 %v116
    %v338 = vunpack.c.h.b16 %v116
    %v339 = vunpack.c.l.b16 %v117
    %v340 = vunpack.c.h.b16 %v117
    %v341 = vunpack.c.l.b16 %v118
    %v342 = vunpack.c.h.b16 %v118
    %v343 = vunpack.c.l.b16 %v119
    %v344 = vunpack.c.h.b16 %v119
    %v345 = vunpack.c.l.b16 %v120
    %v346 = vunpack.c.h.b16 %v120
    %v347 = vunpack.c.l.b16 %v121
    %v348 = vunpack.c.h.b16 %v121
    %v349 = vunpack.c.l.b16 %v122
    %v350 = vunpack.c.h.b16 %v122
    %v351 = vunpack.c.l.b16 %v123
    %v352 = vunpack.c.h.b16 %v123
    %v353 = vunpack.c.l.b16 %v124
    %v354 = vunpack.c.h.b16 %v124
    %v355 = vunpack.c.l.b16 %v125
    %v356 = vunpack.c.h.b16 %v125
    %v357 = vunpack.c.l.b16 %v126
    %v358 = vunpack.c.h.b16 %v126
    %v359 = vunpack.c.l.b16 %v127
    %v360 = vunpack.c.h.b16 %v127
    %v361 = vunpack.c.l.b16 %v128
    %v362 = vunpack.c.h.b16 %v128
    %v363 = vunpack.c.l.b16 %v129
    %v364 = vunpack.c.h.b16 %v129
    %v365 = vunpack.c.l.b16 %v130
    %v366 = vunpack.c.h.b16 %v130
    %v367 = vunpack.c.l.b16 %v131
    %v368 = vunpack.c.h.b16 %v131
    %v369 = vunpack.c.l.b16 %v132
    %v370 = vunpack.c.h.b16 %v132
    %v371 = vunpack.c.l.b16 %v133
    %v372 = vunpack.c.h.b16 %v133
    %v373 = vunpack.c.l.b16 %v134
    %v374 = vunpack.c.h.b16 %v134
    %v375 = vpack.c.b16 %v251, %v247
    %v376 = vpack.c.b16 %v252, %v248
    %v377 = vpack.c.b16 %v253, %v249
    %v378 = vpack.c.b16 %v254, %v250
    %v379 = vpack.c.b16 %v259, %v255
    %v380 = vpack.c.b16 %v260, %v256
    %v381 = vpack.c.b16 %v261, %v257
    %v382 = vpack.c.b16 %v262, %v258
    %v383 = vpack.c.b16 %v267, %v263
    %v384 = vpack.c.b16 %v268, %v264
    %v385 = vpack.c.b16 %v269, %v265
    %v386 = vpack.c.b16 %v270, %v266
    %v387 = vpack.c.b16 %v275, %v271
    %v388 = vpack.c.b16 %v276, %v272
    %v389 = vpack.c.b16 %v277, %v273
    %v390 = vpack.c.b16 %v278, %v274
    %v391 = vpack.c.b16 %v283, %v279
    %v392 = vpack.c.b16 %v284, %v280
    %v393 = vpack.c.b16 %v285, %v281
    %v394 = vpack.c.b16 %v286, %v282
    %v395 = vpack.c.b16 %v291, %v287
    %v396 = vpack.c.b16 %v292, %v288
    %v397 = vpack.c.b16 %v293, %v289
    %v398 = vpack.c.b16 %v294, %v290
    %v399 = vpack.c.b16 %v299, %v295
    %v400 = vpack.c.b16 %v300, %v296
    %v401 = vpack.c.b16 %v301, %v297
    %v402 = vpack.c.b16 %v302, %v298
    %v403 = vpack.c.b16 %v307, %v303
    %v404 = vpack.c.b16 %v308, %v304
    %v405 = vpack.c.b16 %v309, %v305
    %v406 = vpack.c.b16 %v310, %v306
    %v407 = vpack.c.b16 %v315, %v311
    %v408 = vpack.c.b16 %v316, %v312
    %v409 = vpack.c.b16 %v317, %v313
    %v410 = vpack.c.b16 %v318, %v314
    %v411 = vpack.c.b16 %v323, %v319
    %v412 = vpack.c.b16 %v324, %v320
    %v413 = vpack.c.b16 %v325, %v321
    %v414 = vpack.c.b16 %v326, %v322
    %v415 = vpack.c.b16 %v331, %v327
    %v416 = vpack.c.b16 %v332, %v328
    %v417 = vpack.c.b16 %v333, %v329
    %v418 = vpack.c.b16 %v334, %v330
    %v419 = vpack.c.b16 %v339, %v335
    %v420 = vpack.c.b16 %v340, %v336
    %v421 = vpack.c.b16 %v341, %v337
    %v422 = vpack.c.b16 %v342, %v338
    %v423 = vpack.c.b16 %v347, %v343
    %v424 = vpack.c.b16 %v348, %v344
    %v425 = vpack.c.b16 %v349, %v345
    %v426 = vpack.c.b16 %v350, %v346
    %v427 = vpack.c.b16 %v355, %v351
    %v428 = vpack.c.b16 %v356, %v352
    %v429 = vpack.c.b16 %v357, %v353
    %v430 = vpack.c.b16 %v358, %v354
    %v431 = vpack.c.b16 %v363, %v359
    %v432 = vpack.c.b16 %v364, %v360
    %v433 = vpack.c.b16 %v365, %v361
    %v434 = vpack.c.b16 %v366, %v362
    %v435 = vpack.c.b16 %v371, %v367
    %v436 = vpack.c.b16 %v372, %v368
    %v437 = vpack.c.b16 %v373, %v369
    %v438 = vpack.c.b16 %v374, %v370
    %503 = vmatprep.subr.bf16.mxu0 %v376
    %504 = vmatpush1.bf16.msra.mxu0 %v375
    %505 = vmatprep.subr.bf16.mxu0 %v380
    %506 = vmatpush1.bf16.msra.mxu0 %v379
    %507 = vmatprep.subr.bf16.mxu0 %v384
    %508 = vmatpush1.bf16.msra.mxu0 %v383
    %509 = vmatprep.subr.bf16.mxu0 %v388
    %510 = vmatpush1.bf16.msra.mxu0 %v387
    %511 = vmatprep.subr.bf16.mxu0 %v392
    %512 = vmatpush1.bf16.msra.mxu0 %v391
    %513 = vmatprep.subr.bf16.mxu0 %v396
    %514 = vmatpush1.bf16.msra.mxu0 %v395
    %515 = vmatprep.subr.bf16.mxu0 %v400
    %516 = vmatpush1.bf16.msra.mxu0 %v399
    %517 = vmatprep.subr.bf16.mxu0 %v404
    %518 = vmatpush1.bf16.msra.mxu0 %v403
    %519 = vmatprep.subr.bf16.mxu0 %v408
    %520 = vmatpush1.bf16.msra.mxu0 %v407
    %521 = vmatprep.subr.bf16.mxu0 %v412
    %522 = vmatpush1.bf16.msra.mxu0 %v411
    %523 = vmatprep.subr.bf16.mxu0 %v416
    %524 = vmatpush1.bf16.msra.mxu0 %v415
    %525 = vmatprep.subr.bf16.mxu0 %v420
    %526 = vmatpush1.bf16.msra.mxu0 %v419
    %527 = vmatprep.subr.bf16.mxu0 %v424
    %528 = vmatpush1.bf16.msra.mxu0 %v423
    %529 = vmatprep.subr.bf16.mxu0 %v428
    %530 = vmatpush1.bf16.msra.mxu0 %v427
    %531 = vmatprep.subr.bf16.mxu0 %v432
    %532 = vmatpush1.bf16.msra.mxu0 %v431
    %533 = vmatprep.subr.bf16.mxu0 %v436
    %534 = vmatpush1.bf16.msra.mxu0 %v435
    %535 = vmatprep.mubr.bf16.mxu0 %v180
    %536 = vmatmul.mubr.bf16.gmra.mrb[0].mxu0 %v179
    %v537 = vpop.f32.mrb[0].mxu0
    %v538 = vadd.f32 %v160, %v537
    %v539 = vpop.f32.mrb[0].mxu0
    %v540 = vadd.f32 %v164, %v539
    %v541 = vpop.f32.mrb[0].mxu0
    %v542 = vadd.f32 %v160, %v541
    %v543 = vpop.f32.mrb[0].mxu0
    %v544 = vadd.f32 %v164, %v543
    %545 = vdwg.mxu0
    %546 = vmatprep.subr.bf16.mxu0 %v378
    %547 = vmatpush1.bf16.msra.mxu0 %v377
    %548 = vmatprep.subr.bf16.mxu0 %v382
    %549 = vmatpush1.bf16.msra.mxu0 %v381
    %550 = vmatprep.subr.bf16.mxu0 %v386
    %551 = vmatpush1.bf16.msra.mxu0 %v385
    %552 = vmatprep.subr.bf16.mxu0 %v390
    %553 = vmatpush1.bf16.msra.mxu0 %v389
    %554 = vmatprep.subr.bf16.mxu0 %v394
    %555 = vmatpush1.bf16.msra.mxu0 %v393
    %556 = vmatprep.subr.bf16.mxu0 %v398
    %557 = vmatpush1.bf16.msra.mxu0 %v397
    %558 = vmatprep.subr.bf16.mxu0 %v402
    %559 = vmatpush1.bf16.msra.mxu0 %v401
    %560 = vmatprep.subr.bf16.mxu0 %v406
    %561 = vmatpush1.bf16.msra.mxu0 %v405
    %562 = vmatprep.subr.bf16.mxu0 %v410
    %563 = vmatpush1.bf16.msra.mxu0 %v409
    %564 = vmatprep.subr.bf16.mxu0 %v414
    %565 = vmatpush1.bf16.msra.mxu0 %v413
    %566 = vmatprep.subr.bf16.mxu0 %v418
    %567 = vmatpush1.bf16.msra.mxu0 %v417
    %568 = vmatprep.subr.bf16.mxu0 %v422
    %569 = vmatpush1.bf16.msra.mxu0 %v421
    %570 = vmatprep.subr.bf16.mxu0 %v426
    %571 = vmatpush1.bf16.msra.mxu0 %v425
    %572 = vmatprep.subr.bf16.mxu0 %v430
    %573 = vmatpush1.bf16.msra.mxu0 %v429
    %574 = vmatprep.subr.bf16.mxu0 %v434
    %575 = vmatpush1.bf16.msra.mxu0 %v433
    %576 = vmatprep.subr.bf16.mxu0 %v438
    %577 = vmatpush1.bf16.msra.mxu0 %v437
    %578 = vmatprep.mubr.bf16.mxu0 %v180
    %579 = vmatmul.mubr.bf16.gmra.mrb[0].mxu0 %v179
    %v580 = vpop.f32.mrb[0].mxu0
    %v581 = vadd.f32 %v168, %v580
    %v582 = vpop.f32.mrb[0].mxu0
    %v583 = vadd.f32 %v172, %v582
    %v584 = vpop.f32.mrb[0].mxu0
    %v585 = vadd.f32 %v168, %v584
    %v586 = vpop.f32.mrb[0].mxu0
    %v587 = vadd.f32 %v172, %v586
    %588 = vdwg.mxu0
    %vm589 = vcmp.gt.f32.partialorder %v538, 0.0
    %vm590 = vcmp.gt.f32.partialorder %v540, 0.0
    %vm591 = vcmp.gt.f32.partialorder %v581, 0.0
    %vm592 = vcmp.gt.f32.partialorder %v583, 0.0
    %vm593 = vcmp.gt.f32.partialorder %v542, 0.0
    %vm594 = vcmp.gt.f32.partialorder %v544, 0.0
    %vm595 = vcmp.gt.f32.partialorder %v585, 0.0
    %vm596 = vcmp.gt.f32.partialorder %v587, 0.0
    %v597 = vmul.f32 %v538, 0.01
    %v598 = vmul.f32 %v540, 0.01
    %v599 = vmul.f32 %v581, 0.01
    %v600 = vmul.f32 %v583, 0.01
    %v601 = vmul.f32 %v542, 0.01
    %v602 = vmul.f32 %v544, 0.01
    %v603 = vmul.f32 %v585, 0.01
    %v604 = vmul.f32 %v587, 0.01
    %v605 = vsel %vm589, %v538, %v597
    %v606 = vsel %vm590, %v540, %v598
    %v607 = vsel %vm591, %v581, %v599
    %v608 = vsel %vm592, %v583, %v600
    %v609 = vsel %vm593, %v542, %v601
    %v610 = vsel %vm594, %v544, %v602
    %v611 = vsel %vm595, %v585, %v603
    %v612 = vsel %vm596, %v587, %v604
    %v613 = vpack.c.bf16 %v609, %v605
    %v614 = vpack.c.bf16 %v610, %v606
    %v615 = vpack.c.bf16 %v611, %v607
    %v616 = vpack.c.bf16 %v612, %v608
    %v617 = vld [vmem:[#allocation4] sm:$0xf]
    %v618 = vld [vmem:[#allocation4 + $0x4] sm:$0xf]
    %v619 = vld [vmem:[#allocation4 + $0x8] sm:$0xf]
    %v620 = vld [vmem:[#allocation4 + $0xc] sm:$0xf]
    %v621 = vld [vmem:[#allocation4 + $0x10] sm:$0xf]
    %v622 = vld [vmem:[#allocation4 + $0x14] sm:$0xf]
    %v623 = vld [vmem:[#allocation4 + $0x18] sm:$0xf]
    %v624 = vld [vmem:[#allocation4 + $0x1c] sm:$0xf]
    %v625 = vld [vmem:[#allocation4 + $0x20] sm:$0xf]
    %v626 = vld [vmem:[#allocation4 + $0x24] sm:$0xf]
    %v627 = vld [vmem:[#allocation4 + $0x28] sm:$0xf]
    %v628 = vld [vmem:[#allocation4 + $0x2c] sm:$0xf]
    %v629 = vld [vmem:[#allocation4 + $0x30] sm:$0xf]
    %v630 = vld [vmem:[#allocation4 + $0x34] sm:$0xf]
    %v631 = vld [vmem:[#allocation4 + $0x38] sm:$0xf]
    %v632 = vld [vmem:[#allocation4 + $0x3c] sm:$0xf]
    %v633 = vld [vmem:[#allocation4 + $0x40] sm:$0xf]
    %v634 = vld [vmem:[#allocation4 + $0x44] sm:$0xf]
    %v635 = vld [vmem:[#allocation4 + $0x48] sm:$0xf]
    %v636 = vld [vmem:[#allocation4 + $0x4c] sm:$0xf]
    %v637 = vld [vmem:[#allocation4 + $0x50] sm:$0xf]
    %v638 = vld [vmem:[#allocation4 + $0x54] sm:$0xf]
    %v639 = vld [vmem:[#allocation4 + $0x58] sm:$0xf]
    %v640 = vld [vmem:[#allocation4 + $0x5c] sm:$0xf]
    %v641 = vld [vmem:[#allocation4 + $0x60] sm:$0xf]
    %v642 = vld [vmem:[#allocation4 + $0x64] sm:$0xf]
    %v643 = vld [vmem:[#allocation4 + $0x68] sm:$0xf]
    %v644 = vld [vmem:[#allocation4 + $0x6c] sm:$0xf]
    %v645 = vld [vmem:[#allocation4 + $0x70] sm:$0xf]
    %v646 = vld [vmem:[#allocation4 + $0x74] sm:$0xf]
    %v647 = vld [vmem:[#allocation4 + $0x78] sm:$0xf]
    %v648 = vld [vmem:[#allocation4 + $0x7c] sm:$0xf]
    %v649 = vld [vmem:[#allocation4 + $0x80] sm:$0xf]
    %v650 = vld [vmem:[#allocation4 + $0x84] sm:$0xf]
    %v651 = vld [vmem:[#allocation4 + $0x88] sm:$0xf]
    %v652 = vld [vmem:[#allocation4 + $0x8c] sm:$0xf]
    %v653 = vld [vmem:[#allocation4 + $0x90] sm:$0xf]
    %v654 = vld [vmem:[#allocation4 + $0x94] sm:$0xf]
    %v655 = vld [vmem:[#allocation4 + $0x98] sm:$0xf]
    %v656 = vld [vmem:[#allocation4 + $0x9c] sm:$0xf]
    %v657 = vld [vmem:[#allocation4 + $0xa0] sm:$0xf]
    %v658 = vld [vmem:[#allocation4 + $0xa4] sm:$0xf]
    %v659 = vld [vmem:[#allocation4 + $0xa8] sm:$0xf]
    %v660 = vld [vmem:[#allocation4 + $0xac] sm:$0xf]
    %v661 = vld [vmem:[#allocation4 + $0xb0] sm:$0xf]
    %v662 = vld [vmem:[#allocation4 + $0xb4] sm:$0xf]
    %v663 = vld [vmem:[#allocation4 + $0xb8] sm:$0xf]
    %v664 = vld [vmem:[#allocation4 + $0xbc] sm:$0xf]
    %v665 = vld [vmem:[#allocation4 + $0xc0] sm:$0xf]
    %v666 = vld [vmem:[#allocation4 + $0xc4] sm:$0xf]
    %v667 = vld [vmem:[#allocation4 + $0xc8] sm:$0xf]
    %v668 = vld [vmem:[#allocation4 + $0xcc] sm:$0xf]
    %v669 = vld [vmem:[#allocation4 + $0xd0] sm:$0xf]
    %v670 = vld [vmem:[#allocation4 + $0xd4] sm:$0xf]
    %v671 = vld [vmem:[#allocation4 + $0xd8] sm:$0xf]
    %v672 = vld [vmem:[#allocation4 + $0xdc] sm:$0xf]
    %v673 = vld [vmem:[#allocation4 + $0xe0] sm:$0xf]
    %v674 = vld [vmem:[#allocation4 + $0xe4] sm:$0xf]
    %v675 = vld [vmem:[#allocation4 + $0xe8] sm:$0xf]
    %v676 = vld [vmem:[#allocation4 + $0xec] sm:$0xf]
    %v677 = vld [vmem:[#allocation4 + $0xf0] sm:$0xf]
    %v678 = vld [vmem:[#allocation4 + $0xf4] sm:$0xf]
    %v679 = vld [vmem:[#allocation4 + $0xf8] sm:$0xf]
    %v680 = vld [vmem:[#allocation4 + $0xfc] sm:$0xf]
    %v681 = vlaneseq
    %v682 = vshrl.u32 %v681, 7
    %v683 = vsub.s32 1, %v682
    %v684 = vrot.slane %v67, %v683
    %v749 = vunpack.c.l.b16 %v617
    %v750 = vunpack.c.l.b16 %v618
    %v751 = vunpack.c.l.b16 %v619
    %v752 = vunpack.c.l.b16 %v620
    %v753 = vunpack.c.l.b16 %v621
    %v754 = vunpack.c.l.b16 %v622
    %v755 = vunpack.c.l.b16 %v623
    %v756 = vunpack.c.l.b16 %v624
    %v757 = vunpack.c.l.b16 %v625
    %v758 = vunpack.c.l.b16 %v626
    %v759 = vunpack.c.l.b16 %v627
    %v760 = vunpack.c.l.b16 %v628
    %v761 = vunpack.c.l.b16 %v629
    %v762 = vunpack.c.l.b16 %v630
    %v763 = vunpack.c.l.b16 %v631
    %v764 = vunpack.c.l.b16 %v632
    %v765 = vunpack.c.l.b16 %v633
    %v766 = vunpack.c.l.b16 %v634
    %v767 = vunpack.c.l.b16 %v635
    %v768 = vunpack.c.l.b16 %v636
    %v769 = vunpack.c.l.b16 %v637
    %v770 = vunpack.c.l.b16 %v638
    %v771 = vunpack.c.l.b16 %v639
    %v772 = vunpack.c.l.b16 %v640
    %v773 = vunpack.c.l.b16 %v641
    %v774 = vunpack.c.l.b16 %v642
    %v775 = vunpack.c.l.b16 %v643
    %v776 = vunpack.c.l.b16 %v644
    %v777 = vunpack.c.l.b16 %v645
    %v778 = vunpack.c.l.b16 %v646
    %v779 = vunpack.c.l.b16 %v647
    %v780 = vunpack.c.l.b16 %v648
    %v781 = vunpack.c.l.b16 %v649
    %v782 = vunpack.c.l.b16 %v650
    %v783 = vunpack.c.l.b16 %v651
    %v784 = vunpack.c.l.b16 %v652
    %v785 = vunpack.c.l.b16 %v653
    %v786 = vunpack.c.l.b16 %v654
    %v787 = vunpack.c.l.b16 %v655
    %v788 = vunpack.c.l.b16 %v656
    %v789 = vunpack.c.l.b16 %v657
    %v790 = vunpack.c.l.b16 %v658
    %v791 = vunpack.c.l.b16 %v659
    %v792 = vunpack.c.l.b16 %v660
    %v793 = vunpack.c.l.b16 %v661
    %v794 = vunpack.c.l.b16 %v662
    %v795 = vunpack.c.l.b16 %v663
    %v796 = vunpack.c.l.b16 %v664
    %v797 = vunpack.c.l.b16 %v665
    %v798 = vunpack.c.l.b16 %v666
    %v799 = vunpack.c.l.b16 %v667
    %v800 = vunpack.c.l.b16 %v668
    %v801 = vunpack.c.l.b16 %v669
    %v802 = vunpack.c.l.b16 %v670
    %v803 = vunpack.c.l.b16 %v671
    %v804 = vunpack.c.l.b16 %v672
    %v805 = vunpack.c.l.b16 %v673
    %v806 = vunpack.c.l.b16 %v674
    %v807 = vunpack.c.l.b16 %v675
    %v808 = vunpack.c.l.b16 %v676
    %v809 = vunpack.c.l.b16 %v677
    %v810 = vunpack.c.l.b16 %v678
    %v811 = vunpack.c.l.b16 %v679
    %v812 = vunpack.c.l.b16 %v680
    %v813 = vpack.c.b16 %v750, %v749
    %v814 = vpack.c.b16 %v752, %v751
    %v815 = vpack.c.b16 %v754, %v753
    %v816 = vpack.c.b16 %v756, %v755
    %v817 = vpack.c.b16 %v758, %v757
    %v818 = vpack.c.b16 %v760, %v759
    %v819 = vpack.c.b16 %v762, %v761
    %v820 = vpack.c.b16 %v764, %v763
    %v821 = vpack.c.b16 %v766, %v765
    %v822 = vpack.c.b16 %v768, %v767
    %v823 = vpack.c.b16 %v770, %v769
    %v824 = vpack.c.b16 %v772, %v771
    %v825 = vpack.c.b16 %v774, %v773
    %v826 = vpack.c.b16 %v776, %v775
    %v827 = vpack.c.b16 %v778, %v777
    %v828 = vpack.c.b16 %v780, %v779
    %v829 = vpack.c.b16 %v782, %v781
    %v830 = vpack.c.b16 %v784, %v783
    %v831 = vpack.c.b16 %v786, %v785
    %v832 = vpack.c.b16 %v788, %v787
    %v833 = vpack.c.b16 %v790, %v789
    %v834 = vpack.c.b16 %v792, %v791
    %v835 = vpack.c.b16 %v794, %v793
    %v836 = vpack.c.b16 %v796, %v795
    %v837 = vpack.c.b16 %v798, %v797
    %v838 = vpack.c.b16 %v800, %v799
    %v839 = vpack.c.b16 %v802, %v801
    %v840 = vpack.c.b16 %v804, %v803
    %v841 = vpack.c.b16 %v806, %v805
    %v842 = vpack.c.b16 %v808, %v807
    %v843 = vpack.c.b16 %v810, %v809
    %v844 = vpack.c.b16 %v812, %v811
    %877 = vmatprep.subr.bf16.mxu0 0
    %878 = vmatpush1.bf16.msra.mxu0 %v813
    %879 = vmatprep.subr.bf16.mxu0 0
    %880 = vmatpush1.bf16.msra.mxu0 %v814
    %881 = vmatprep.subr.bf16.mxu0 0
    %882 = vmatpush1.bf16.msra.mxu0 %v815
    %883 = vmatprep.subr.bf16.mxu0 0
    %884 = vmatpush1.bf16.msra.mxu0 %v816
    %885 = vmatprep.subr.bf16.mxu0 0
    %886 = vmatpush1.bf16.msra.mxu0 %v817
    %887 = vmatprep.subr.bf16.mxu0 0
    %888 = vmatpush1.bf16.msra.mxu0 %v818
    %889 = vmatprep.subr.bf16.mxu0 0
    %890 = vmatpush1.bf16.msra.mxu0 %v819
    %891 = vmatprep.subr.bf16.mxu0 0
    %892 = vmatpush1.bf16.msra.mxu0 %v820
    %893 = vmatprep.subr.bf16.mxu0 0
    %894 = vmatpush1.bf16.msra.mxu0 %v821
    %895 = vmatprep.subr.bf16.mxu0 0
    %896 = vmatpush1.bf16.msra.mxu0 %v822
    %897 = vmatprep.subr.bf16.mxu0 0
    %898 = vmatpush1.bf16.msra.mxu0 %v823
    %899 = vmatprep.subr.bf16.mxu0 0
    %900 = vmatpush1.bf16.msra.mxu0 %v824
    %901 = vmatprep.subr.bf16.mxu0 0
    %902 = vmatpush1.bf16.msra.mxu0 %v825
    %903 = vmatprep.subr.bf16.mxu0 0
    %904 = vmatpush1.bf16.msra.mxu0 %v826
    %905 = vmatprep.subr.bf16.mxu0 0
    %906 = vmatpush1.bf16.msra.mxu0 %v827
    %907 = vmatprep.subr.bf16.mxu0 0
    %908 = vmatpush1.bf16.msra.mxu0 %v828
    %909 = vmatprep.mubr.bf16.mxu0 %v614
    %910 = vmatmul.mubr.bf16.gmra.mrb[0].mxu0 %v613
    %v911 = vpop.f32.mrb[0].mxu0
    %v912 = vadd.f32 %v684, %v911
    %v913 = vpop.f32.mrb[0].mxu0
    %v914 = vpop.f32.mrb[0].mxu0
    %v915 = vadd.f32 %v684, %v914
    %v916 = vpop.f32.mrb[0].mxu0
    %917 = vdwg.mxu0
    %918 = vmatprep.subr.bf16.mxu0 0
    %919 = vmatpush1.bf16.msra.mxu0 %v829
    %920 = vmatprep.subr.bf16.mxu0 0
    %921 = vmatpush1.bf16.msra.mxu0 %v830
    %922 = vmatprep.subr.bf16.mxu0 0
    %923 = vmatpush1.bf16.msra.mxu0 %v831
    %924 = vmatprep.subr.bf16.mxu0 0
    %925 = vmatpush1.bf16.msra.mxu0 %v832
    %926 = vmatprep.subr.bf16.mxu0 0
    %927 = vmatpush1.bf16.msra.mxu0 %v833
    %928 = vmatprep.subr.bf16.mxu0 0
    %929 = vmatpush1.bf16.msra.mxu0 %v834
    %930 = vmatprep.subr.bf16.mxu0 0
    %931 = vmatpush1.bf16.msra.mxu0 %v835
    %932 = vmatprep.subr.bf16.mxu0 0
    %933 = vmatpush1.bf16.msra.mxu0 %v836
    %934 = vmatprep.subr.bf16.mxu0 0
    %935 = vmatpush1.bf16.msra.mxu0 %v837
    %936 = vmatprep.subr.bf16.mxu0 0
    %937 = vmatpush1.bf16.msra.mxu0 %v838
    %938 = vmatprep.subr.bf16.mxu0 0
    %939 = vmatpush1.bf16.msra.mxu0 %v839
    %940 = vmatprep.subr.bf16.mxu0 0
    %941 = vmatpush1.bf16.msra.mxu0 %v840
    %942 = vmatprep.subr.bf16.mxu0 0
    %943 = vmatpush1.bf16.msra.mxu0 %v841
    %944 = vmatprep.subr.bf16.mxu0 0
    %945 = vmatpush1.bf16.msra.mxu0 %v842
    %946 = vmatprep.subr.bf16.mxu0 0
    %947 = vmatpush1.bf16.msra.mxu0 %v843
    %948 = vmatprep.subr.bf16.mxu0 0
    %949 = vmatpush1.bf16.msra.mxu0 %v844
    %950 = vmatprep.mubr.bf16.mxu0 %v616
    %951 = vmatmul.mubr.bf16.gmra.mrb[0].mxu0 %v615
    %v952 = vpop.f32.mrb[0].mxu0
    %v953 = vadd.f32 %v912, %v952
    %v954 = vpop.f32.mrb[0].mxu0
    %v955 = vpop.f32.mrb[0].mxu0
    %v956 = vadd.f32 %v915, %v955
    %v957 = vpop.f32.mrb[0].mxu0
    %958 = vdwg.mxu0
    %959 = vst [vmem:[%s7] sm:$0xff] %v953
    %960 = vst [vmem:[%s7 + $0x8] sm:$0xff] %v956
    %961 = vrot.lane.b32.xlu0 %v69, 31
    %v962 = vpop.permute.xlu0 %961
    %963 = vrot.lane.b32.xlu0 %v70, 31
    %v964 = vpop.permute.xlu0 %963
    %v965 = vrot.slane %v962, 4
    %v966 = vrot.slane %v964, 4
    %v969 = vunpack.c.l.bf16 %v965
    %v970 = vunpack.c.l.bf16 %v966
    %v971 = vmul.f32 %v953, 0.5
    %v972 = vmul.f32 %v956, 0.5
    %v973 = vmul.f32 %v971, 1.442695
    %v974 = vpow.pop %v973
    %v975 = vmul.f32 %v972, 1.442695
    %v976 = vpow.pop %v975
    %979 = vrot.lane.b32.xlu0 %v974, 108
    %v980 = vpop.permute.xlu0 %979
    %981 = vrot.lane.b32.xlu0 %v976, 108
    %v982 = vpop.permute.xlu0 %981
    %v985 = vmul.f32 %v969, %v980
    %v986 = vmul.f32 %v970, %v982
    %v987 = vadd.f32 %v985, %v953
    %v988 = vadd.f32 %v986, %v956
    %v989 = vpack.c.bf16 %v988, %v987
    %v990 = vld [vmem:[%s3] sm:$0xff]
    %v991 = vld [vmem:[%s3 + $0x8] sm:$0xff]
    %v992 = vld [vmem:[%s3 + $0x10] sm:$0xff]
    %v993 = vld [vmem:[%s3 + $0x18] sm:$0xff]
    %v994 = vld [vmem:[%s3 + $0x20] sm:$0x33]
    %v995 = vld [vmem:[%s3 + $0x28] sm:$0x33]
    %v996 = vlaneseq
    %v997 = vshrl.u32 %v996, 7
    %v998 = vsub.s32 2, %v997
    %v999 = vrot.slane %v67, %v998
    %v1000 = vlaneseq
    %v1001 = vshrl.u32 %v1000, 7
    %v1002 = vsub.s32 6, %v1001
    %v1003 = vrot.slane %v67, %v1002
    %v1004 = vlaneseq
    %v1005 = vshrl.u32 %v1004, 7
    %v1006 = vsub.s32 2, %v1005
    %v1007 = vrot.slane %v68, %v1006
    %v1008 = vlaneseq
    %v1009 = vshrl.u32 %v1008, 7
    %v1010 = vsub.s32 6, %v1009
    %v1011 = vrot.slane %v68, %v1010
    %v1016 = vlaneseq
    %v1017 = vshrl.u32 %v1016, 7
    %v1018 = vsub.s32 2, %v1017
    %v1019 = vrot.slane %v999, %v1018
    %v1020 = vlaneseq
    %v1021 = vshrl.u32 %v1020, 7
    %v1022 = vsub.s32 2, %v1021
    %v1023 = vrot.slane %v1003, %v1022
    %v1024 = vlaneseq
    %v1025 = vshrl.u32 %v1024, 7
    %v1026 = vsub.s32 2, %v1025
    %v1027 = vrot.slane %v1007, %v1026
    %v1028 = vlaneseq
    %v1029 = vshrl.u32 %v1028, 7
    %v1030 = vsub.s32 2, %v1029
    %v1031 = vrot.slane %v1011, %v1030
    %v1038 = vunpack.c.l.b16 %v990
    %v1039 = vunpack.c.h.b16 %v990
    %v1040 = vunpack.c.l.b16 %v991
    %v1041 = vunpack.c.h.b16 %v991
    %v1042 = vunpack.c.l.b16 %v992
    %v1043 = vunpack.c.h.b16 %v992
    %v1044 = vunpack.c.l.b16 %v993
    %v1045 = vunpack.c.h.b16 %v993
    %v1046 = vunpack.c.l.b16 %v994
    %v1047 = vunpack.c.h.b16 %v994
    %v1048 = vunpack.c.l.b16 %v995
    %v1049 = vunpack.c.h.b16 %v995
    %v1050 = vpack.c.b16 %v1042, %v1038
    %v1051 = vpack.c.b16 %v1043, %v1039
    %v1052 = vpack.c.b16 %v1044, %v1040
    %v1053 = vpack.c.b16 %v1045, %v1041
    %v1054 = vpack.c.b16 %v1046, %v1046
    %v1055 = vpack.c.b16 %v1047, %v1047
    %v1056 = vpack.c.b16 %v1048, %v1048
    %v1057 = vpack.c.b16 %v1049, %v1049
    %vm1062 = vcmask 162816
    %v1064 = vsel %vm1062, %v989, 0
    %vm1066 = vcmask 1041408
    %v1068 = vsel %vm1066, %v1054, 0
    %v1071 = vsel %vm1066, %v1055, 0
    %v1074 = vsel %vm1066, %v1056, 0
    %v1077 = vsel %vm1066, %v1057, 0
    %1079 = vmatprep.subr.bf16.mxu0 %v1051
    %1080 = vmatpush1.bf16.msra.mxu0 %v1050
    %1081 = vmatprep.subr.bf16.mxu0 %v1071
    %1082 = vmatpush1.bf16.msra.mxu0 %v1068
    %1083 = vmatprep.subr.bf16.mxu0 0
    %1084 = vmatpush1.bf16.msra.mxu0 0
    %1085 = vmatprep.subr.bf16.mxu0 0
    %1086 = vmatpush1.bf16.msra.mxu0 0
    %1087 = vmatprep.subr.bf16.mxu0 0
    %1088 = vmatpush1.bf16.msra.mxu0 0
    %1089 = vmatprep.subr.bf16.mxu0 0
    %1090 = vmatpush1.bf16.msra.mxu0 0
    %1091 = vmatprep.subr.bf16.mxu0 0
    %1092 = vmatpush1.bf16.msra.mxu0 0
    %1093 = vmatprep.subr.bf16.mxu0 0
    %1094 = vmatpush1.bf16.msra.mxu0 0
    %1095 = vmatprep.subr.bf16.mxu0 0
    %1096 = vmatpush1.bf16.msra.mxu0 0
    %1097 = vmatprep.subr.bf16.mxu0 0
    %1098 = vmatpush1.bf16.msra.mxu0 0
    %1099 = vmatprep.subr.bf16.mxu0 0
    %1100 = vmatpush1.bf16.msra.mxu0 0
    %1101 = vmatprep.subr.bf16.mxu0 0
    %1102 = vmatpush1.bf16.msra.mxu0 0
    %1103 = vmatprep.subr.bf16.mxu0 0
    %1104 = vmatpush1.bf16.msra.mxu0 0
    %1105 = vmatprep.subr.bf16.mxu0 0
    %1106 = vmatpush1.bf16.msra.mxu0 0
    %1107 = vmatprep.subr.bf16.mxu0 0
    %1108 = vmatpush1.bf16.msra.mxu0 0
    %1109 = vmatprep.subr.bf16.mxu0 0
    %1110 = vmatpush1.bf16.msra.mxu0 0
    %1111 = vmatprep.mubr.bf16.mxu0 0
    %1112 = vmatmul.mubr.bf16.gmra.mrb[0].mxu0 %v1064
    %v1113 = vpop.f32.mrb[0].mxu0
    %v1114 = vadd.f32 %v1019, %v1113
    %v1115 = vpop.f32.mrb[0].mxu0
    %v1116 = vadd.f32 %v1023, %v1115
    %v1117 = vpop.f32.mrb[0].mxu0
    %v1118 = vadd.f32 %v1019, %v1117
    %v1119 = vpop.f32.mrb[0].mxu0
    %v1120 = vadd.f32 %v1023, %v1119
    %1121 = vdwg.mxu0
    %1122 = vmatprep.subr.bf16.mxu0 %v1053
    %1123 = vmatpush1.bf16.msra.mxu0 %v1052
    %1124 = vmatprep.subr.bf16.mxu0 %v1077
    %1125 = vmatpush1.bf16.msra.mxu0 %v1074
    %1126 = vmatprep.subr.bf16.mxu0 0
    %1127 = vmatpush1.bf16.msra.mxu0 0
    %1128 = vmatprep.subr.bf16.mxu0 0
    %1129 = vmatpush1.bf16.msra.mxu0 0
    %1130 = vmatprep.subr.bf16.mxu0 0
    %1131 = vmatpush1.bf16.msra.mxu0 0
    %1132 = vmatprep.subr.bf16.mxu0 0
    %1133 = vmatpush1.bf16.msra.mxu0 0
    %1134 = vmatprep.subr.bf16.mxu0 0
    %1135 = vmatpush1.bf16.msra.mxu0 0
    %1136 = vmatprep.subr.bf16.mxu0 0
    %1137 = vmatpush1.bf16.msra.mxu0 0
    %1138 = vmatprep.subr.bf16.mxu0 0
    %1139 = vmatpush1.bf16.msra.mxu0 0
    %1140 = vmatprep.subr.bf16.mxu0 0
    %1141 = vmatpush1.bf16.msra.mxu0 0
    %1142 = vmatprep.subr.bf16.mxu0 0
    %1143 = vmatpush1.bf16.msra.mxu0 0
    %1144 = vmatprep.subr.bf16.mxu0 0
    %1145 = vmatpush1.bf16.msra.mxu0 0
    %1146 = vmatprep.subr.bf16.mxu0 0
    %1147 = vmatpush1.bf16.msra.mxu0 0
    %1148 = vmatprep.subr.bf16.mxu0 0
    %1149 = vmatpush1.bf16.msra.mxu0 0
    %1150 = vmatprep.subr.bf16.mxu0 0
    %1151 = vmatpush1.bf16.msra.mxu0 0
    %1152 = vmatprep.subr.bf16.mxu0 0
    %1153 = vmatpush1.bf16.msra.mxu0 0
    %1154 = vmatprep.mubr.bf16.mxu0 0
    %1155 = vmatmul.mubr.bf16.gmra.mrb[0].mxu0 %v1064
    %v1156 = vpop.f32.mrb[0].mxu0
    %v1157 = vadd.f32 %v1027, %v1156
    %v1158 = vpop.f32.mrb[0].mxu0
    %v1159 = vadd.f32 %v1031, %v1158
    %v1160 = vpop.f32.mrb[0].mxu0
    %v1161 = vadd.f32 %v1027, %v1160
    %v1162 = vpop.f32.mrb[0].mxu0
    %v1163 = vadd.f32 %v1031, %v1162
    %1164 = vdwg.mxu0
    %vm1165 = vcmp.gt.f32.partialorder %v1114, 0.0
    %vm1166 = vcmp.gt.f32.partialorder %v1116, 0.0
    %vm1167 = vcmp.gt.f32.partialorder %v1157, 0.0
    %vm1168 = vcmp.gt.f32.partialorder %v1159, 0.0
    %vm1169 = vcmp.gt.f32.partialorder %v1118, 0.0
    %vm1170 = vcmp.gt.f32.partialorder %v1120, 0.0
    %vm1171 = vcmp.gt.f32.partialorder %v1161, 0.0
    %vm1172 = vcmp.gt.f32.partialorder %v1163, 0.0
    %v1173 = vmul.f32 %v1114, 0.01
    %v1174 = vmul.f32 %v1116, 0.01
    %v1175 = vmul.f32 %v1157, 0.01
    %v1176 = vmul.f32 %v1159, 0.01
    %v1177 = vmul.f32 %v1118, 0.01
    %v1178 = vmul.f32 %v1120, 0.01
    %v1179 = vmul.f32 %v1161, 0.01
    %v1180 = vmul.f32 %v1163, 0.01
    %v1181 = vsel %vm1165, %v1114, %v1173
    %v1182 = vsel %vm1166, %v1116, %v1174
    %v1183 = vsel %vm1167, %v1157, %v1175
    %v1184 = vsel %vm1168, %v1159, %v1176
    %v1185 = vsel %vm1169, %v1118, %v1177
    %v1186 = vsel %vm1170, %v1120, %v1178
    %v1187 = vsel %vm1171, %v1161, %v1179
    %v1188 = vsel %vm1172, %v1163, %v1180
    %v1189 = vpack.c.bf16 %v1185, %v1181
    %v1190 = vpack.c.bf16 %v1186, %v1182
    %v1191 = vpack.c.bf16 %v1187, %v1183
    %v1192 = vpack.c.bf16 %v1188, %v1184
    %v1193 = vld [vmem:[#allocation6] sm:$0xff]
    %v1194 = vld [vmem:[#allocation6 + $0x8] sm:$0xff]
    %v1195 = vld [vmem:[#allocation6 + $0x10] sm:$0xff]
    %v1196 = vld [vmem:[#allocation6 + $0x18] sm:$0xff]
    %v1197 = vld [vmem:[#allocation6 + $0x20] sm:$0xff]
    %v1198 = vld [vmem:[#allocation6 + $0x28] sm:$0xff]
    %v1199 = vld [vmem:[#allocation6 + $0x30] sm:$0xff]
    %v1200 = vld [vmem:[#allocation6 + $0x38] sm:$0xff]
    %v1201 = vld [vmem:[#allocation6 + $0x40] sm:$0xff]
    %v1202 = vld [vmem:[#allocation6 + $0x48] sm:$0xff]
    %v1203 = vld [vmem:[#allocation6 + $0x50] sm:$0xff]
    %v1204 = vld [vmem:[#allocation6 + $0x58] sm:$0xff]
    %v1205 = vld [vmem:[#allocation6 + $0x60] sm:$0xff]
    %v1206 = vld [vmem:[#allocation6 + $0x68] sm:$0xff]
    %v1207 = vld [vmem:[#allocation6 + $0x70] sm:$0xff]
    %v1208 = vld [vmem:[#allocation6 + $0x78] sm:$0xff]
    %v1209 = vld [vmem:[#allocation6 + $0x80] sm:$0xff]
    %v1210 = vld [vmem:[#allocation6 + $0x88] sm:$0xff]
    %v1211 = vld [vmem:[#allocation6 + $0x90] sm:$0xff]
    %v1212 = vld [vmem:[#allocation6 + $0x98] sm:$0xff]
    %v1213 = vld [vmem:[#allocation6 + $0xa0] sm:$0xff]
    %v1214 = vld [vmem:[#allocation6 + $0xa8] sm:$0xff]
    %v1215 = vld [vmem:[#allocation6 + $0xb0] sm:$0xff]
    %v1216 = vld [vmem:[#allocation6 + $0xb8] sm:$0xff]
    %v1217 = vld [vmem:[#allocation6 + $0xc0] sm:$0xff]
    %v1218 = vld [vmem:[#allocation6 + $0xc8] sm:$0xff]
    %v1219 = vld [vmem:[#allocation6 + $0xd0] sm:$0xff]
    %v1220 = vld [vmem:[#allocation6 + $0xd8] sm:$0xff]
    %v1221 = vld [vmem:[#allocation6 + $0xe0] sm:$0xff]
    %v1222 = vld [vmem:[#allocation6 + $0xe8] sm:$0xff]
    %v1223 = vld [vmem:[#allocation6 + $0xf0] sm:$0xff]
    %v1224 = vld [vmem:[#allocation6 + $0xf8] sm:$0xff]
    %v1225 = vld [vmem:[#allocation6 + $0x100] sm:$0xff]
    %v1226 = vld [vmem:[#allocation6 + $0x108] sm:$0xff]
    %v1227 = vld [vmem:[#allocation6 + $0x110] sm:$0xff]
    %v1228 = vld [vmem:[#allocation6 + $0x118] sm:$0xff]
    %v1229 = vld [vmem:[#allocation6 + $0x120] sm:$0xff]
    %v1230 = vld [vmem:[#allocation6 + $0x128] sm:$0xff]
    %v1231 = vld [vmem:[#allocation6 + $0x130] sm:$0xff]
    %v1232 = vld [vmem:[#allocation6 + $0x138] sm:$0xff]
    %v1233 = vld [vmem:[#allocation6 + $0x140] sm:$0xff]
    %v1234 = vld [vmem:[#allocation6 + $0x148] sm:$0xff]
    %v1235 = vld [vmem:[#allocation6 + $0x150] sm:$0xff]
    %v1236 = vld [vmem:[#allocation6 + $0x158] sm:$0xff]
    %v1237 = vld [vmem:[#allocation6 + $0x160] sm:$0xff]
    %v1238 = vld [vmem:[#allocation6 + $0x168] sm:$0xff]
    %v1239 = vld [vmem:[#allocation6 + $0x170] sm:$0xff]
    %v1240 = vld [vmem:[#allocation6 + $0x178] sm:$0xff]
    %v1241 = vld [vmem:[#allocation6 + $0x180] sm:$0xff]
    %v1242 = vld [vmem:[#allocation6 + $0x188] sm:$0xff]
    %v1243 = vld [vmem:[#allocation6 + $0x190] sm:$0xff]
    %v1244 = vld [vmem:[#allocation6 + $0x198] sm:$0xff]
    %v1245 = vld [vmem:[#allocation6 + $0x1a0] sm:$0xff]
    %v1246 = vld [vmem:[#allocation6 + $0x1a8] sm:$0xff]
    %v1247 = vld [vmem:[#allocation6 + $0x1b0] sm:$0xff]
    %v1248 = vld [vmem:[#allocation6 + $0x1b8] sm:$0xff]
    %v1249 = vld [vmem:[#allocation6 + $0x1c0] sm:$0xff]
    %v1250 = vld [vmem:[#allocation6 + $0x1c8] sm:$0xff]
    %v1251 = vld [vmem:[#allocation6 + $0x1d0] sm:$0xff]
    %v1252 = vld [vmem:[#allocation6 + $0x1d8] sm:$0xff]
    %v1253 = vld [vmem:[#allocation6 + $0x1e0] sm:$0xff]
    %v1254 = vld [vmem:[#allocation6 + $0x1e8] sm:$0xff]
    %v1255 = vld [vmem:[#allocation6 + $0x1f0] sm:$0xff]
    %v1256 = vld [vmem:[#allocation6 + $0x1f8] sm:$0xff]
    %v1257 = vlaneseq
    %v1258 = vshrl.u32 %v1257, 7
    %v1259 = vsub.s32 3, %v1258
    %v1260 = vrot.slane %v67, %v1259
    %v1261 = vlaneseq
    %v1262 = vshrl.u32 %v1261, 7
    %v1263 = vsub.s32 7, %v1262
    %v1264 = vrot.slane %v67, %v1263
    %v1267 = vlaneseq
    %v1268 = vshrl.u32 %v1267, 7
    %v1269 = vsub.s32 3, %v1268
    %v1270 = vrot.slane %v1260, %v1269
    %v1271 = vlaneseq
    %v1272 = vshrl.u32 %v1271, 7
    %v1273 = vsub.s32 3, %v1272
    %v1274 = vrot.slane %v1264, %v1273
    %v1339 = vunpack.c.l.b16 %v1193
    %v1340 = vunpack.c.h.b16 %v1193
    %v1341 = vunpack.c.l.b16 %v1194
    %v1342 = vunpack.c.h.b16 %v1194
    %v1343 = vunpack.c.l.b16 %v1195
    %v1344 = vunpack.c.h.b16 %v1195
    %v1345 = vunpack.c.l.b16 %v1196
    %v1346 = vunpack.c.h.b16 %v1196
    %v1347 = vunpack.c.l.b16 %v1197
    %v1348 = vunpack.c.h.b16 %v1197
    %v1349 = vunpack.c.l.b16 %v1198
    %v1350 = vunpack.c.h.b16 %v1198
    %v1351 = vunpack.c.l.b16 %v1199
    %v1352 = vunpack.c.h.b16 %v1199
    %v1353 = vunpack.c.l.b16 %v1200
    %v1354 = vunpack.c.h.b16 %v1200
    %v1355 = vunpack.c.l.b16 %v1201
    %v1356 = vunpack.c.h.b16 %v1201
    %v1357 = vunpack.c.l.b16 %v1202
    %v1358 = vunpack.c.h.b16 %v1202
    %v1359 = vunpack.c.l.b16 %v1203
    %v1360 = vunpack.c.h.b16 %v1203
    %v1361 = vunpack.c.l.b16 %v1204
    %v1362 = vunpack.c.h.b16 %v1204
    %v1363 = vunpack.c.l.b16 %v1205
    %v1364 = vunpack.c.h.b16 %v1205
    %v1365 = vunpack.c.l.b16 %v1206
    %v1366 = vunpack.c.h.b16 %v1206
    %v1367 = vunpack.c.l.b16 %v1207
    %v1368 = vunpack.c.h.b16 %v1207
    %v1369 = vunpack.c.l.b16 %v1208
    %v1370 = vunpack.c.h.b16 %v1208
    %v1371 = vunpack.c.l.b16 %v1209
    %v1372 = vunpack.c.h.b16 %v1209
    %v1373 = vunpack.c.l.b16 %v1210
    %v1374 = vunpack.c.h.b16 %v1210
    %v1375 = vunpack.c.l.b16 %v1211
    %v1376 = vunpack.c.h.b16 %v1211
    %v1377 = vunpack.c.l.b16 %v1212
    %v1378 = vunpack.c.h.b16 %v1212
    %v1379 = vunpack.c.l.b16 %v1213
    %v1380 = vunpack.c.h.b16 %v1213
    %v1381 = vunpack.c.l.b16 %v1214
    %v1382 = vunpack.c.h.b16 %v1214
    %v1383 = vunpack.c.l.b16 %v1215
    %v1384 = vunpack.c.h.b16 %v1215
    %v1385 = vunpack.c.l.b16 %v1216
    %v1386 = vunpack.c.h.b16 %v1216
    %v1387 = vunpack.c.l.b16 %v1217
    %v1388 = vunpack.c.h.b16 %v1217
    %v1389 = vunpack.c.l.b16 %v1218
    %v1390 = vunpack.c.h.b16 %v1218
    %v1391 = vunpack.c.l.b16 %v1219
    %v1392 = vunpack.c.h.b16 %v1219
    %v1393 = vunpack.c.l.b16 %v1220
    %v1394 = vunpack.c.h.b16 %v1220
    %v1395 = vunpack.c.l.b16 %v1221
    %v1396 = vunpack.c.h.b16 %v1221
    %v1397 = vunpack.c.l.b16 %v1222
    %v1398 = vunpack.c.h.b16 %v1222
    %v1399 = vunpack.c.l.b16 %v1223
    %v1400 = vunpack.c.h.b16 %v1223
    %v1401 = vunpack.c.l.b16 %v1224
    %v1402 = vunpack.c.h.b16 %v1224
    %v1403 = vunpack.c.l.b16 %v1225
    %v1404 = vunpack.c.h.b16 %v1225
    %v1405 = vunpack.c.l.b16 %v1226
    %v1406 = vunpack.c.h.b16 %v1226
    %v1407 = vunpack.c.l.b16 %v1227
    %v1408 = vunpack.c.h.b16 %v1227
    %v1409 = vunpack.c.l.b16 %v1228
    %v1410 = vunpack.c.h.b16 %v1228
    %v1411 = vunpack.c.l.b16 %v1229
    %v1412 = vunpack.c.h.b16 %v1229
    %v1413 = vunpack.c.l.b16 %v1230
    %v1414 = vunpack.c.h.b16 %v1230
    %v1415 = vunpack.c.l.b16 %v1231
    %v1416 = vunpack.c.h.b16 %v1231
    %v1417 = vunpack.c.l.b16 %v1232
    %v1418 = vunpack.c.h.b16 %v1232
    %v1419 = vunpack.c.l.b16 %v1233
    %v1420 = vunpack.c.h.b16 %v1233
    %v1421 = vunpack.c.l.b16 %v1234
    %v1422 = vunpack.c.h.b16 %v1234
    %v1423 = vunpack.c.l.b16 %v1235
    %v1424 = vunpack.c.h.b16 %v1235
    %v1425 = vunpack.c.l.b16 %v1236
    %v1426 = vunpack.c.h.b16 %v1236
    %v1427 = vunpack.c.l.b16 %v1237
    %v1428 = vunpack.c.h.b16 %v1237
    %v1429 = vunpack.c.l.b16 %v1238
    %v1430 = vunpack.c.h.b16 %v1238
    %v1431 = vunpack.c.l.b16 %v1239
    %v1432 = vunpack.c.h.b16 %v1239
    %v1433 = vunpack.c.l.b16 %v1240
    %v1434 = vunpack.c.h.b16 %v1240
    %v1435 = vunpack.c.l.b16 %v1241
    %v1436 = vunpack.c.h.b16 %v1241
    %v1437 = vunpack.c.l.b16 %v1242
    %v1438 = vunpack.c.h.b16 %v1242
    %v1439 = vunpack.c.l.b16 %v1243
    %v1440 = vunpack.c.h.b16 %v1243
    %v1441 = vunpack.c.l.b16 %v1244
    %v1442 = vunpack.c.h.b16 %v1244
    %v1443 = vunpack.c.l.b16 %v1245
    %v1444 = vunpack.c.h.b16 %v1245
    %v1445 = vunpack.c.l.b16 %v1246
    %v1446 = vunpack.c.h.b16 %v1246
    %v1447 = vunpack.c.l.b16 %v1247
    %v1448 = vunpack.c.h.b16 %v1247
    %v1449 = vunpack.c.l.b16 %v1248
    %v1450 = vunpack.c.h.b16 %v1248
    %v1451 = vunpack.c.l.b16 %v1249
    %v1452 = vunpack.c.h.b16 %v1249
    %v1453 = vunpack.c.l.b16 %v1250
    %v1454 = vunpack.c.h.b16 %v1250
    %v1455 = vunpack.c.l.b16 %v1251
    %v1456 = vunpack.c.h.b16 %v1251
    %v1457 = vunpack.c.l.b16 %v1252
    %v1458 = vunpack.c.h.b16 %v1252
    %v1459 = vunpack.c.l.b16 %v1253
    %v1460 = vunpack.c.h.b16 %v1253
    %v1461 = vunpack.c.l.b16 %v1254
    %v1462 = vunpack.c.h.b16 %v1254
    %v1463 = vunpack.c.l.b16 %v1255
    %v1464 = vunpack.c.h.b16 %v1255
    %v1465 = vunpack.c.l.b16 %v1256
    %v1466 = vunpack.c.h.b16 %v1256
    %v1467 = vpack.c.b16 %v1341, %v1339
    %v1468 = vpack.c.b16 %v1342, %v1340
    %v1469 = vpack.c.b16 %v1345, %v1343
    %v1470 = vpack.c.b16 %v1346, %v1344
    %v1471 = vpack.c.b16 %v1349, %v1347
    %v1472 = vpack.c.b16 %v1350, %v1348
    %v1473 = vpack.c.b16 %v1353, %v1351
    %v1474 = vpack.c.b16 %v1354, %v1352
    %v1475 = vpack.c.b16 %v1357, %v1355
    %v1476 = vpack.c.b16 %v1358, %v1356
    %v1477 = vpack.c.b16 %v1361, %v1359
    %v1478 = vpack.c.b16 %v1362, %v1360
    %v1479 = vpack.c.b16 %v1365, %v1363
    %v1480 = vpack.c.b16 %v1366, %v1364
    %v1481 = vpack.c.b16 %v1369, %v1367
    %v1482 = vpack.c.b16 %v1370, %v1368
    %v1483 = vpack.c.b16 %v1373, %v1371
    %v1484 = vpack.c.b16 %v1374, %v1372
    %v1485 = vpack.c.b16 %v1377, %v1375
    %v1486 = vpack.c.b16 %v1378, %v1376
    %v1487 = vpack.c.b16 %v1381, %v1379
    %v1488 = vpack.c.b16 %v1382, %v1380
    %v1489 = vpack.c.b16 %v1385, %v1383
    %v1490 = vpack.c.b16 %v1386, %v1384
    %v1491 = vpack.c.b16 %v1389, %v1387
    %v1492 = vpack.c.b16 %v1390, %v1388
    %v1493 = vpack.c.b16 %v1393, %v1391
    %v1494 = vpack.c.b16 %v1394, %v1392
    %v1495 = vpack.c.b16 %v1397, %v1395
    %v1496 = vpack.c.b16 %v1398, %v1396
    %v1497 = vpack.c.b16 %v1401, %v1399
    %v1498 = vpack.c.b16 %v1402, %v1400
    %v1499 = vpack.c.b16 %v1405, %v1403
    %v1500 = vpack.c.b16 %v1406, %v1404
    %v1501 = vpack.c.b16 %v1409, %v1407
    %v1502 = vpack.c.b16 %v1410, %v1408
    %v1503 = vpack.c.b16 %v1413, %v1411
    %v1504 = vpack.c.b16 %v1414, %v1412
    %v1505 = vpack.c.b16 %v1417, %v1415
    %v1506 = vpack.c.b16 %v1418, %v1416
    %v1507 = vpack.c.b16 %v1421, %v1419
    %v1508 = vpack.c.b16 %v1422, %v1420
    %v1509 = vpack.c.b16 %v1425, %v1423
    %v1510 = vpack.c.b16 %v1426, %v1424
    %v1511 = vpack.c.b16 %v1429, %v1427
    %v1512 = vpack.c.b16 %v1430, %v1428
    %v1513 = vpack.c.b16 %v1433, %v1431
    %v1514 = vpack.c.b16 %v1434, %v1432
    %v1515 = vpack.c.b16 %v1437, %v1435
    %v1516 = vpack.c.b16 %v1438, %v1436
    %v1517 = vpack.c.b16 %v1441, %v1439
    %v1518 = vpack.c.b16 %v1442, %v1440
    %v1519 = vpack.c.b16 %v1445, %v1443
    %v1520 = vpack.c.b16 %v1446, %v1444
    %v1521 = vpack.c.b16 %v1449, %v1447
    %v1522 = vpack.c.b16 %v1450, %v1448
    %v1523 = vpack.c.b16 %v1453, %v1451
    %v1524 = vpack.c.b16 %v1454, %v1452
    %v1525 = vpack.c.b16 %v1457, %v1455
    %v1526 = vpack.c.b16 %v1458, %v1456
    %v1527 = vpack.c.b16 %v1461, %v1459
    %v1528 = vpack.c.b16 %v1462, %v1460
    %v1529 = vpack.c.b16 %v1465, %v1463
    %v1530 = vpack.c.b16 %v1466, %v1464
    %1595 = vmatprep.subr.bf16.mxu0 %v1468
    %1596 = vmatpush1.bf16.msra.mxu0 %v1467
    %1597 = vmatprep.subr.bf16.mxu0 %v1470
    %1598 = vmatpush1.bf16.msra.mxu0 %v1469
    %1599 = vmatprep.subr.bf16.mxu0 %v1472
    %1600 = vmatpush1.bf16.msra.mxu0 %v1471
    %1601 = vmatprep.subr.bf16.mxu0 %v1474
    %1602 = vmatpush1.bf16.msra.mxu0 %v1473
    %1603 = vmatprep.subr.bf16.mxu0 %v1476
    %1604 = vmatpush1.bf16.msra.mxu0 %v1475
    %1605 = vmatprep.subr.bf16.mxu0 %v1478
    %1606 = vmatpush1.bf16.msra.mxu0 %v1477
    %1607 = vmatprep.subr.bf16.mxu0 %v1480
    %1608 = vmatpush1.bf16.msra.mxu0 %v1479
    %1609 = vmatprep.subr.bf16.mxu0 %v1482
    %1610 = vmatpush1.bf16.msra.mxu0 %v1481
    %1611 = vmatprep.subr.bf16.mxu0 %v1484
    %1612 = vmatpush1.bf16.msra.mxu0 %v1483
    %1613 = vmatprep.subr.bf16.mxu0 %v1486
    %1614 = vmatpush1.bf16.msra.mxu0 %v1485
    %1615 = vmatprep.subr.bf16.mxu0 %v1488
    %1616 = vmatpush1.bf16.msra.mxu0 %v1487
    %1617 = vmatprep.subr.bf16.mxu0 %v1490
    %1618 = vmatpush1.bf16.msra.mxu0 %v1489
    %1619 = vmatprep.subr.bf16.mxu0 %v1492
    %1620 = vmatpush1.bf16.msra.mxu0 %v1491
    %1621 = vmatprep.subr.bf16.mxu0 %v1494
    %1622 = vmatpush1.bf16.msra.mxu0 %v1493
    %1623 = vmatprep.subr.bf16.mxu0 %v1496
    %1624 = vmatpush1.bf16.msra.mxu0 %v1495
    %1625 = vmatprep.subr.bf16.mxu0 %v1498
    %1626 = vmatpush1.bf16.msra.mxu0 %v1497
    %1627 = vmatprep.mubr.bf16.mxu0 %v1190
    %1628 = vmatmul.mubr.bf16.gmra.mrb[0].mxu0 %v1189
    %v1629 = vpop.f32.mrb[0].mxu0
    %v1630 = vadd.f32 %v1270, %v1629
    %v1631 = vpop.f32.mrb[0].mxu0
    %v1632 = vadd.f32 %v1274, %v1631
    %v1633 = vpop.f32.mrb[0].mxu0
    %v1634 = vadd.f32 %v1270, %v1633
    %v1635 = vpop.f32.mrb[0].mxu0
    %v1636 = vadd.f32 %v1274, %v1635
    %1637 = vdwg.mxu0
    %1638 = vmatprep.subr.bf16.mxu0 %v1500
    %1639 = vmatpush1.bf16.msra.mxu0 %v1499
    %1640 = vmatprep.subr.bf16.mxu0 %v1502
    %1641 = vmatpush1.bf16.msra.mxu0 %v1501
    %1642 = vmatprep.subr.bf16.mxu0 %v1504
    %1643 = vmatpush1.bf16.msra.mxu0 %v1503
    %1644 = vmatprep.subr.bf16.mxu0 %v1506
    %1645 = vmatpush1.bf16.msra.mxu0 %v1505
    %1646 = vmatprep.subr.bf16.mxu0 %v1508
    %1647 = vmatpush1.bf16.msra.mxu0 %v1507
    %1648 = vmatprep.subr.bf16.mxu0 %v1510
    %1649 = vmatpush1.bf16.msra.mxu0 %v1509
    %1650 = vmatprep.subr.bf16.mxu0 %v1512
    %1651 = vmatpush1.bf16.msra.mxu0 %v1511
    %1652 = vmatprep.subr.bf16.mxu0 %v1514
    %1653 = vmatpush1.bf16.msra.mxu0 %v1513
    %1654 = vmatprep.subr.bf16.mxu0 %v1516
    %1655 = vmatpush1.bf16.msra.mxu0 %v1515
    %1656 = vmatprep.subr.bf16.mxu0 %v1518
    %1657 = vmatpush1.bf16.msra.mxu0 %v1517
    %1658 = vmatprep.subr.bf16.mxu0 %v1520
    %1659 = vmatpush1.bf16.msra.mxu0 %v1519
    %1660 = vmatprep.subr.bf16.mxu0 %v1522
    %1661 = vmatpush1.bf16.msra.mxu0 %v1521
    %1662 = vmatprep.subr.bf16.mxu0 %v1524
    %1663 = vmatpush1.bf16.msra.mxu0 %v1523
    %1664 = vmatprep.subr.bf16.mxu0 %v1526
    %1665 = vmatpush1.bf16.msra.mxu0 %v1525
    %1666 = vmatprep.subr.bf16.mxu0 %v1528
    %1667 = vmatpush1.bf16.msra.mxu0 %v1527
    %1668 = vmatprep.subr.bf16.mxu0 %v1530
    %1669 = vmatpush1.bf16.msra.mxu0 %v1529
    %1670 = vmatprep.mubr.bf16.mxu0 %v1192
    %1671 = vmatmul.mubr.bf16.gmra.mrb[0].mxu0 %v1191
    %v1672 = vpop.f32.mrb[0].mxu0
    %v1673 = vadd.f32 %v1630, %v1672
    %v1674 = vpop.f32.mrb[0].mxu0
    %v1675 = vadd.f32 %v1632, %v1674
    %v1676 = vpop.f32.mrb[0].mxu0
    %v1677 = vadd.f32 %v1634, %v1676
    %v1678 = vpop.f32.mrb[0].mxu0
    %v1679 = vadd.f32 %v1636, %v1678
    %1680 = vdwg.mxu0
    %v1681 = vpack.c.bf16 %v1677, %v1673
    %v1682 = vpack.c.bf16 %v1679, %v1675
    %v1683 = vtanh.bf16.pop %v1681
    %v1684 = vtanh.bf16.pop %v1682
    %v1687 = vunpack.c.l.b16 %v1683
    %v1688 = vunpack.c.l.b16 %v1684
    %v1689 = vunpack.c.h.b16 %v1683
    %v1690 = vunpack.c.h.b16 %v1684
    %v1691 = vpack.c.b16 %v1688, %v1687
    %v1692 = vpack.c.b16 %v1690, %v1689
    %1695 = vst [vmem:[%s6] sm:$0xff] %v1691
    %1696 = vst [vmem:[%s6 + $0x8] sm:$0xff] %v1692
    // Predicated region
    $region38: #{_lambda_.1} parent=1 // pred_check
      _
    $region39: #{_lambda_.1} parent=1 // pred_check_branch
      %1698 = sbr.rel (0) target = $region41
    $region40: #{_lambda_.1} parent=1 // pred_region
      _
    $region41: #{_lambda_.1} parent=1 // pred_fallthru
      _
    // Predicated region
    $region42: #{_lambda_.1} parent=1 // pred_check
      _
    $region43: #{_lambda_.1} parent=1 // pred_check_branch
      %1700 = sbr.rel (0) target = $region45
    $region44: #{_lambda_.1} parent=1 // pred_region
      _
    $region45: #{_lambda_.1} parent=1 // pred_fallthru
      _
    // Predicated region
    $region46: #{_lambda_.1} parent=1 // pred_check
      _
    $region47: #{_lambda_.1} parent=1 // pred_check_branch
      %1702 = sbr.rel (0) target = $region49
    $region48: #{_lambda_.1} parent=1 // pred_region
      _
    $region49: #{_lambda_.1} parent=1 // pred_fallthru
      _
    // Predicated region
    $region50: #{_lambda_.1} parent=1 // pred_check
      _
    $region51: #{_lambda_.1} parent=1 // pred_check_branch
      %1704 = sbr.rel (0) target = $region53
    $region52: #{_lambda_.1} parent=1 // pred_region
      _
    $region53: #{_lambda_.1} parent=1 // pred_fallthru
      _
    %1705 = vsyncpa [#allocation3], 1
    %1706 = vsyncpa [#allocation5], 1

</llo_original>
